<compile_context>
chip_gen: v7x
topology: tpu7x:2x2x1
jax: 0.10.0
libtpu: 0.0.40
codegen_flags: <defaults>
</compile_context>

<pallas_src>
import math
import functools

import jax
import jax.numpy as jnp
from jax import lax
from jax.experimental import pallas as pl
from jax.experimental.pallas import tpu as pltpu


def _gelu_tanh(x):
    c = math.sqrt(2.0 / math.pi)
    return 0.5 * x * (1.0 + jnp.tanh(c * (x + 0.044715 * x * x * x)))


def _encoder_kernel(x_ref, wqkv_ref, bqkv_ref, wo_ref, bo_ref,
                    w1_ref, b1_ref, w2_ref, b2_ref, gamma_ref, beta_ref,
                    out_ref, attn_ref,
                    q_scr, k_scr, v_scr, acc_scr, *, eps):
    Bt, L, D = x_ref.shape
    H = q_scr.shape[1]
    E = q_scr.shape[3]
    G = attn_ref.shape[1]                    # heads per group
    hg = pl.program_id(1)
    n_groups = pl.num_programs(1)

    # ---- once per batch block: fused QKV projection (bf16 MXU) + head-major relayout ----
    @pl.when(hg == 0)
    def _init():
        xb = x_ref[...].reshape(Bt * L, D).astype(jnp.bfloat16)
        qkv = jnp.dot(xb, wqkv_ref[...],
                      preferred_element_type=jnp.float32) + bqkv_ref[0]   # (Bt*L, 3D) f32
        scale = 1.0 / math.sqrt(E)
        for bt in range(Bt):
            r0 = bt * L
            for h in range(H):
                c0 = h * E
                q_scr[bt, h] = (qkv[r0:r0 + L, c0:c0 + E] * scale).astype(jnp.bfloat16)
                k_scr[bt, h] = qkv[r0:r0 + L, D + c0:D + c0 + E].astype(jnp.bfloat16)
                v_scr[bt, h] = qkv[r0:r0 + L, 2 * D + c0:2 * D + c0 + E].astype(jnp.bfloat16)
        acc_scr[...] = jnp.zeros_like(acc_scr)

    # ---- per head-group attention; Wo folded with G*E contraction depth ------
    head0 = hg * G
    ctx_rows = []
    for bt in range(Bt):
        ctx_heads = []
        for g in range(G):
            h = head0 + g
            qh = q_scr[bt, h]                                            # (L, E) bf16, pre-scaled
            kh = k_scr[bt, h]
            vh = v_scr[bt, h]
            # scores = qh @ kh^T without materializing the transpose
            s = lax.dot_general(qh, kh, (((1,), (1,)), ((), ())),
                                preferred_element_type=jnp.float32)      # (L, L) f32
            s = s - jnp.max(s, axis=-1, keepdims=True)
            p = jnp.exp(s)
            a = p * pl.reciprocal(jnp.sum(p, axis=-1, keepdims=True), approx=True)
            attn_ref[bt, g] = a.astype(attn_ref.dtype)                   # pre-dropout softmax
            ctx_heads.append(jnp.dot(a.astype(jnp.bfloat16), vh,
                                     preferred_element_type=jnp.float32))  # (L, E)
        ctx_rows.append(jnp.concatenate(ctx_heads, axis=-1))             # (L, G*E)
    ctx = jnp.concatenate(ctx_rows, axis=0).astype(jnp.bfloat16)         # (Bt*L, G*E)
    acc_scr[...] += jnp.dot(ctx, wo_ref[...], preferred_element_type=jnp.float32)

    # ---- once per batch block: out-proj bias, residuals, FFN, LayerNorm ------
    @pl.when(hg == n_groups - 1)
    def _finalize():
        xf = x_ref[...].reshape(Bt * L, D)                               # f32
        x1 = xf + acc_scr[...] + bo_ref[0]                               # residual 1
        h1 = jnp.dot(x1.astype(jnp.bfloat16), w1_ref[...],
                     preferred_element_type=jnp.float32) + b1_ref[0]     # (Bt*L, F)
        h1 = _gelu_tanh(h1)
        ffn = jnp.dot(h1.astype(jnp.bfloat16), w2_ref[...],
                      preferred_element_type=jnp.float32) + b2_ref[0]    # (Bt*L, D)
        x2 = x1 + ffn                                                    # residual 2
        mu = jnp.mean(x2, axis=-1, keepdims=True)
        xc = x2 - mu
        var = jnp.mean(xc * xc, axis=-1, keepdims=True)
        y = xc * lax.rsqrt(var + eps)
        out_ref[...] = ((y * gamma_ref[0] + beta_ref[0])
                        .astype(out_ref.dtype).reshape(Bt, L, D))


def _head_group_size(n_heads, d_head):
    """Smallest divisor g of n_heads with g*d_head >= 128 (fill MXU contraction)."""
    for g in range(1, n_heads + 1):
        if n_heads % g == 0 and g * d_head >= 128:
            return g
    return n_heads


def _batch_block_size(batch, seq_len):
    """Pack batch elements per grid step so each step has >= 128 rows."""
    for bt in range(1, batch + 1):
        if batch % bt == 0 and bt * seq_len >= 128:
            return bt
    return batch


def prepare_params(params):
    """Fuse Q/K/V projections and pre-cast matmul weights to bf16.
    Call ONCE at setup time (hoisted out of the per-forward path)."""
    (wq, bq, wk, bk, wv, bv, wo, bo, w1, b1, w2, b2, gamma, beta) = params
    wqkv = jnp.concatenate([wq, wk, wv], axis=1).astype(jnp.bfloat16)
    bqkv = jnp.concatenate([bq, bk, bv], axis=1).astype(jnp.float32)
    return (wqkv, bqkv,
            wo.astype(jnp.bfloat16), bo.astype(jnp.float32),
            w1.astype(jnp.bfloat16), b1.astype(jnp.float32),
            w2.astype(jnp.bfloat16), b2.astype(jnp.float32),
            gamma.astype(jnp.float32), beta.astype(jnp.float32))


def encoder_forward(x, prepared_params, n_heads, *, eps=1e-5,
                    attn_dtype=jnp.bfloat16, block_b=None):
    """x: (B, L, d_model) float32.  prepared_params from prepare_params().
    Returns (y, attn): encoder output (B, L, D) f32 and softmax probabilities
    (B, H, L, L) in attn_dtype (output_attention=True semantics)."""
    B, L, D = x.shape
    H = n_heads
    E = D // n_heads
    (wqkv, bqkv, wo, bo, w1, b1, w2, b2, gamma, beta) = prepared_params
    F = w1.shape[1]

    G = _head_group_size(H, E)               # heads per grid step
    n_groups = H // G
    Bt = block_b if block_b is not None else _batch_block_size(B, L)
    assert B % Bt == 0 and H % G == 0

    kernel = functools.partial(_encoder_kernel, eps=eps)

    def const(shape):
        return pl.BlockSpec(shape, lambda bb, hg: (0,) * len(shape))

    # Explicit scoped-VMEM limit sized from the actual block footprint
    # (double-buffered in/out blocks + single-buffered scratch, 1.5x headroom).
    def _nbytes(shape, dtype):
        n = 1
        for s in shape:
            n *= s
        return n * jnp.dtype(dtype).itemsize

    blocks = [((Bt, L, D), x.dtype), ((D, 3 * D), wqkv.dtype), ((1, 3 * D), bqkv.dtype),
              ((G * E, D), wo.dtype), ((1, D), bo.dtype),
              ((D, F), w1.dtype), ((1, F), b1.dtype),
              ((F, D), w2.dtype), ((1, D), b2.dtype),
              ((1, D), gamma.dtype), ((1, D), beta.dtype),
              ((Bt, L, D), jnp.float32), ((Bt, G, L, L), attn_dtype)]
    scratch = [((Bt, H, L, E), jnp.bfloat16)] * 3 + [((Bt * L, D), jnp.float32)]
    est = (sum(2 * _nbytes(s, d) for s, d in blocks)
           + sum(_nbytes(s, d) for s, d in scratch))
    vmem_limit = min(100 * 1024 * 1024, max(32 * 1024 * 1024, int(est * 1.5)))

    out, attn = pl.pallas_call(
        kernel,
        out_shape=(
            jax.ShapeDtypeStruct((B, L, D), jnp.float32),
            jax.ShapeDtypeStruct((B, H, L, L), attn_dtype),
        ),
        grid_spec=pltpu.PrefetchScalarGridSpec(
            num_scalar_prefetch=0,
            grid=(B // Bt, n_groups),
            in_specs=[
                pl.BlockSpec((Bt, L, D), lambda bb, hg: (bb, 0, 0)),   # x
                const((D, 3 * D)), const((1, 3 * D)),                  # Wqkv, bqkv
                pl.BlockSpec((G * E, D), lambda bb, hg: (hg, 0)),      # Wo row block per group
                const((1, D)),                                         # bo
                const((D, F)), const((1, F)),                          # W1, b1
                const((F, D)), const((1, D)),                          # W2, b2
                const((1, D)), const((1, D)),                          # gamma, beta
            ],
            out_specs=[
                pl.BlockSpec((Bt, L, D), lambda bb, hg: (bb, 0, 0)),
                pl.BlockSpec((Bt, G, L, L), lambda bb, hg: (bb, hg, 0, 0)),
            ],
            scratch_shapes=[
                pltpu.VMEM((Bt, H, L, E), jnp.bfloat16),   # q (pre-scaled), head-major
                pltpu.VMEM((Bt, H, L, E), jnp.bfloat16),   # k
                pltpu.VMEM((Bt, H, L, E), jnp.bfloat16),   # v
                pltpu.VMEM((Bt * L, D), jnp.float32),      # attention-output accumulator
            ],
        ),
        compiler_params=pltpu.CompilerParams(
            dimension_semantics=("parallel", "arbitrary"),
            vmem_limit_bytes=vmem_limit),
    )(x, wqkv, bqkv, wo, bo, w1, b1, w2, b2, gamma, beta)
    return out, attn


def init_params(key, d_model, ffn_dim):
    """Deterministic synthetic parameters.  Linear/conv weights stored as (in, out)."""
    ks = jax.random.split(key, 14)
    s = 1.0 / math.sqrt(d_model)
    sf = 1.0 / math.sqrt(ffn_dim)
    wq = jax.random.uniform(ks[0], (d_model, d_model), jnp.float32, -s, s)
    bq = jax.random.uniform(ks[1], (1, d_model), jnp.float32, -s, s)
    wk = jax.random.uniform(ks[2], (d_model, d_model), jnp.float32, -s, s)
    bk = jax.random.uniform(ks[3], (1, d_model), jnp.float32, -s, s)
    wv = jax.random.uniform(ks[4], (d_model, d_model), jnp.float32, -s, s)
    bv = jax.random.uniform(ks[5], (1, d_model), jnp.float32, -s, s)
    wo = jax.random.uniform(ks[6], (d_model, d_model), jnp.float32, -s, s)
    bo = jax.random.uniform(ks[7], (1, d_model), jnp.float32, -s, s)
    w1 = jax.random.uniform(ks[8], (d_model, ffn_dim), jnp.float32, -s, s)
    b1 = jax.random.uniform(ks[9], (1, ffn_dim), jnp.float32, -s, s)
    w2 = jax.random.uniform(ks[10], (ffn_dim, d_model), jnp.float32, -sf, sf)
    b2 = jax.random.uniform(ks[11], (1, d_model), jnp.float32, -sf, sf)
    gamma = 1.0 + 0.1 * jax.random.normal(ks[12], (1, d_model), jnp.float32)
    beta = 0.1 * jax.random.normal(ks[13], (1, d_model), jnp.float32)
    return (wq, bq, wk, bk, wv, bv, wo, bo, w1, b1, w2, b2, gamma, beta)


def reference(x, params, n_heads, *, eps=1e-5):
    """Plain-JAX reference replicating the torch Encoder forward (eval mode,
    GELU tanh approximation to match the kernel)."""
    (wq, bq, wk, bk, wv, bv, wo, bo, w1, b1, w2, b2, gamma, beta) = params
    B, L, D = x.shape
    E = D // n_heads
    q = (x @ wq + bq[0]).reshape(B, L, n_heads, E)
    k = (x @ wk + bk[0]).reshape(B, L, n_heads, E)
    v = (x @ wv + bv[0]).reshape(B, L, n_heads, E)
    scale = 1.0 / math.sqrt(E)
    scores = jnp.einsum('blhe,bshe->bhls', q, k)
    A = jax.nn.softmax(scale * scores, axis=-1)
    V = jnp.einsum('bhls,bshd->blhd', A, v).reshape(B, L, D)
    new_x = V @ wo + bo[0]
    x1 = x + new_x
    h1 = jax.nn.gelu(x1 @ w1 + b1[0], approximate=True)
    x2 = x1 + (h1 @ w2 + b2[0])
    mu = jnp.mean(x2, axis=-1, keepdims=True)
    var = jnp.mean((x2 - mu) ** 2, axis=-1, keepdims=True)
    y = (x2 - mu) * lax.rsqrt(var + eps) * gamma[0] + beta[0]
    return y, A


if __name__ == "__main__":
    B, L, d_model, n_heads, ffn_dim = 2, 8, 32, 4, 64

    key = jax.random.PRNGKey(0)
    kx, kp = jax.random.split(key)
    x = jax.random.normal(kx, (B, L, d_model), dtype=jnp.float32)
    params = init_params(kp, d_model, ffn_dim)
    prepared = prepare_params(params)   # fused QKV + bf16 weights, hoisted out of the call

    out, attn = encoder_forward(x, prepared, n_heads)
    out = jax.block_until_ready(out)
    attn = jax.block_until_ready(attn)

    ref_out, ref_attn = reference(x, params, n_heads)
    # bf16 MXU operands + bf16 attention output -> loosened tolerances (feedback note).
    err_out = float(jnp.max(jnp.abs(out - ref_out)))
    err_attn = float(jnp.max(jnp.abs(attn.astype(jnp.float32) - ref_attn)))
    assert jnp.allclose(out, ref_out, atol=5e-2, rtol=5e-2), err_out
    assert jnp.allclose(attn.astype(jnp.float32), ref_attn, atol=2e-2, rtol=2e-2), err_attn

    print("KERNEL_OK")
</pallas_src>

<mosaic_0001>
module attributes {stable_mosaic.version = 11 : i64} {
  func.func @_encoder_kernel(%arg0: i32, %arg1: i32, %arg2: memref<2x8x32xf32, #tpu.memory_space<vmem>>, %arg3: memref<32x96xbf16, #tpu.memory_space<vmem>>, %arg4: memref<1x96xf32, #tpu.memory_space<vmem>>, %arg5: memref<32x32xbf16, #tpu.memory_space<vmem>>, %arg6: memref<1x32xf32, #tpu.memory_space<vmem>>, %arg7: memref<32x64xbf16, #tpu.memory_space<vmem>>, %arg8: memref<1x64xf32, #tpu.memory_space<vmem>>, %arg9: memref<64x32xbf16, #tpu.memory_space<vmem>>, %arg10: memref<1x32xf32, #tpu.memory_space<vmem>>, %arg11: memref<1x32xf32, #tpu.memory_space<vmem>>, %arg12: memref<1x32xf32, #tpu.memory_space<vmem>>, %arg13: memref<2x8x32xf32, #tpu.memory_space<vmem>>, %arg14: memref<2x4x8x8xbf16, #tpu.memory_space<vmem>>, %arg15: memref<2x4x8x8xbf16, #tpu.memory_space<vmem>>, %arg16: memref<2x4x8x8xbf16, #tpu.memory_space<vmem>>, %arg17: memref<2x4x8x8xbf16, #tpu.memory_space<vmem>>, %arg18: memref<16x32xf32, #tpu.memory_space<vmem>>) attributes {dimension_semantics = [#tpu.dimension_semantics<parallel>, #tpu.dimension_semantics<arbitrary>], iteration_bounds = array<i64: 1, 1>, scalar_prefetch = 0 : i64, scratch_operands = 4 : i64, tpu.core_type = #tpu.core_type<tc>, window_params = [{transform_indices = @transform_0, window_bounds = array<i64: 2, 8, 32>}, {pipeline_mode = #tpu.pipeline_mode<synchronous>, transform_indices = @transform_1, window_bounds = array<i64: 32, 96>}, {pipeline_mode = #tpu.pipeline_mode<synchronous>, transform_indices = @transform_2, window_bounds = array<i64: 1, 96>}, {transform_indices = @transform_3, window_bounds = array<i64: 32, 32>}, {pipeline_mode = #tpu.pipeline_mode<synchronous>, transform_indices = @transform_4, window_bounds = array<i64: 1, 32>}, {pipeline_mode = #tpu.pipeline_mode<synchronous>, transform_indices = @transform_5, window_bounds = array<i64: 32, 64>}, {pipeline_mode = #tpu.pipeline_mode<synchronous>, transform_indices = @transform_6, window_bounds = array<i64: 1, 64>}, {pipeline_mode = #tpu.pipeline_mode<synchronous>, transform_indices = @transform_7, window_bounds = array<i64: 64, 32>}, {pipeline_mode = #tpu.pipeline_mode<synchronous>, transform_indices = @transform_8, window_bounds = array<i64: 1, 32>}, {pipeline_mode = #tpu.pipeline_mode<synchronous>, transform_indices = @transform_9, window_bounds = array<i64: 1, 32>}, {pipeline_mode = #tpu.pipeline_mode<synchronous>, transform_indices = @transform_10, window_bounds = array<i64: 1, 32>}, {transform_indices = @transform_11, window_bounds = array<i64: 2, 8, 32>}, {transform_indices = @transform_12, window_bounds = array<i64: 2, 4, 8, 8>}]} {
    %c0_i32 = arith.constant 0 : i32
    %0 = arith.cmpi eq, %arg1, %c0_i32 : i32
    %1 = arith.extui %0 : i1 to i32
    %c0_i32_0 = arith.constant 0 : i32
    %2 = arith.cmpi ne, %1, %c0_i32_0 : i32
    scf.if %2 {
      %c0_146 = arith.constant 0 : index
      %c0_147 = arith.constant 0 : index
      %c0_148 = arith.constant 0 : index
      %232 = vector.load %arg2[%c0_146, %c0_147, %c0_148] : memref<2x8x32xf32, #tpu.memory_space<vmem>>, vector<2x8x32xf32>
      %233 = vector.shape_cast %232 : vector<2x8x32xf32> to vector<16x32xf32>
      %234 = arith.truncf %233 : vector<16x32xf32> to vector<16x32xbf16>
      %c0_149 = arith.constant 0 : index
      %c0_150 = arith.constant 0 : index
      %235 = vector.load %arg3[%c0_149, %c0_150] : memref<32x96xbf16, #tpu.memory_space<vmem>>, vector<32x96xbf16>
      %cst_151 = arith.constant dense<0.000000e+00> : vector<16x96xf32>
      %236 = tpu.matmul %234, %235, %cst_151 {dimension_numbers = #tpu.dot_dimension_numbers<[1], [0], [0], [1], [0, 0, 1, 1], [], []>} : vector<16x32xbf16>, vector<32x96xbf16>, vector<16x96xf32> -> vector<16x96xf32>
      %c0_152 = arith.constant 0 : index
      %c0_153 = arith.constant 0 : index
      %237 = vector.load %arg4[%c0_152, %c0_153] : memref<1x96xf32, #tpu.memory_space<vmem>>, vector<1x96xf32>
      %238 = vector.shape_cast %237 : vector<1x96xf32> to vector<96xf32>
      %239 = vector.shape_cast %238 : vector<96xf32> to vector<1x96xf32>
      %240 = vector.broadcast %239 : vector<1x96xf32> to vector<16x96xf32>
      %241 = arith.addf %236, %240 : vector<16x96xf32>
      %242 = vector.extract_strided_slice %241 {offsets = [0, 0], sizes = [8, 8], strides = [1, 1]} : vector<16x96xf32> to vector<8x8xf32>
      %cst_154 = arith.constant 0.353553385 : f32
      %243 = vector.broadcast %cst_154 : f32 to vector<8x8xf32>
      %244 = arith.mulf %242, %243 : vector<8x8xf32>
      %245 = arith.truncf %244 : vector<8x8xf32> to vector<8x8xbf16>
      %c0_155 = arith.constant 0 : index
      %c0_156 = arith.constant 0 : index
      %c0_157 = arith.constant 0 : index
      %c0_158 = arith.constant 0 : index
      %246 = vector.load %arg15[%c0_155, %c0_156, %c0_157, %c0_158] : memref<2x4x8x8xbf16, #tpu.memory_space<vmem>>, vector<1x1x8x8xbf16>
      %247 = vector.shape_cast %246 : vector<1x1x8x8xbf16> to vector<8x8xbf16>
      %248 = vector.shape_cast %245 : vector<8x8xbf16> to vector<1x1x8x8xbf16>
      tpu.vector_store %arg15[%c0_155, %c0_156, %c0_157, %c0_158], %248 {strides = array<i32>} : memref<2x4x8x8xbf16, #tpu.memory_space<vmem>>, vector<1x1x8x8xbf16>,
      %249 = vector.extract_strided_slice %241 {offsets = [0, 32], sizes = [8, 8], strides = [1, 1]} : vector<16x96xf32> to vector<8x8xf32>
      %250 = arith.truncf %249 : vector<8x8xf32> to vector<8x8xbf16>
      %c0_159 = arith.constant 0 : index
      %c0_160 = arith.constant 0 : index
      %c0_161 = arith.constant 0 : index
      %c0_162 = arith.constant 0 : index
      %251 = vector.load %arg16[%c0_159, %c0_160, %c0_161, %c0_162] : memref<2x4x8x8xbf16, #tpu.memory_space<vmem>>, vector<1x1x8x8xbf16>
      %252 = vector.shape_cast %251 : vector<1x1x8x8xbf16> to vector<8x8xbf16>
      %253 = vector.shape_cast %250 : vector<8x8xbf16> to vector<1x1x8x8xbf16>
      tpu.vector_store %arg16[%c0_159, %c0_160, %c0_161, %c0_162], %253 {strides = array<i32>} : memref<2x4x8x8xbf16, #tpu.memory_space<vmem>>, vector<1x1x8x8xbf16>,
      %254 = vector.extract_strided_slice %241 {offsets = [0, 64], sizes = [8, 8], strides = [1, 1]} : vector<16x96xf32> to vector<8x8xf32>
      %255 = arith.truncf %254 : vector<8x8xf32> to vector<8x8xbf16>
      %c0_163 = arith.constant 0 : index
      %c0_164 = arith.constant 0 : index
      %c0_165 = arith.constant 0 : index
      %c0_166 = arith.constant 0 : index
      %256 = vector.load %arg17[%c0_163, %c0_164, %c0_165, %c0_166] : memref<2x4x8x8xbf16, #tpu.memory_space<vmem>>, vector<1x1x8x8xbf16>
      %257 = vector.shape_cast %256 : vector<1x1x8x8xbf16> to vector<8x8xbf16>
      %258 = vector.shape_cast %255 : vector<8x8xbf16> to vector<1x1x8x8xbf16>
      tpu.vector_store %arg17[%c0_163, %c0_164, %c0_165, %c0_166], %258 {strides = array<i32>} : memref<2x4x8x8xbf16, #tpu.memory_space<vmem>>, vector<1x1x8x8xbf16>,
      %259 = vector.extract_strided_slice %241 {offsets = [0, 8], sizes = [8, 8], strides = [1, 1]} : vector<16x96xf32> to vector<8x8xf32>
      %cst_167 = arith.constant 0.353553385 : f32
      %260 = vector.broadcast %cst_167 : f32 to vector<8x8xf32>
      %261 = arith.mulf %259, %260 : vector<8x8xf32>
      %262 = arith.truncf %261 : vector<8x8xf32> to vector<8x8xbf16>
      %c0_168 = arith.constant 0 : index
      %c1_169 = arith.constant 1 : index
      %c0_170 = arith.constant 0 : index
      %c0_171 = arith.constant 0 : index
      %263 = vector.load %arg15[%c0_168, %c1_169, %c0_170, %c0_171] : memref<2x4x8x8xbf16, #tpu.memory_space<vmem>>, vector<1x1x8x8xbf16>
      %264 = vector.shape_cast %263 : vector<1x1x8x8xbf16> to vector<8x8xbf16>
      %265 = vector.shape_cast %262 : vector<8x8xbf16> to vector<1x1x8x8xbf16>
      tpu.vector_store %arg15[%c0_168, %c1_169, %c0_170, %c0_171], %265 {strides = array<i32>} : memref<2x4x8x8xbf16, #tpu.memory_space<vmem>>, vector<1x1x8x8xbf16>,
      %266 = vector.extract_strided_slice %241 {offsets = [0, 40], sizes = [8, 8], strides = [1, 1]} : vector<16x96xf32> to vector<8x8xf32>
      %267 = arith.truncf %266 : vector<8x8xf32> to vector<8x8xbf16>
      %c0_172 = arith.constant 0 : index
      %c1_173 = arith.constant 1 : index
      %c0_174 = arith.constant 0 : index
      %c0_175 = arith.constant 0 : index
      %268 = vector.load %arg16[%c0_172, %c1_173, %c0_174, %c0_175] : memref<2x4x8x8xbf16, #tpu.memory_space<vmem>>, vector<1x1x8x8xbf16>
      %269 = vector.shape_cast %268 : vector<1x1x8x8xbf16> to vector<8x8xbf16>
      %270 = vector.shape_cast %267 : vector<8x8xbf16> to vector<1x1x8x8xbf16>
      tpu.vector_store %arg16[%c0_172, %c1_173, %c0_174, %c0_175], %270 {strides = array<i32>} : memref<2x4x8x8xbf16, #tpu.memory_space<vmem>>, vector<1x1x8x8xbf16>,
      %271 = vector.extract_strided_slice %241 {offsets = [0, 72], sizes = [8, 8], strides = [1, 1]} : vector<16x96xf32> to vector<8x8xf32>
      %272 = arith.truncf %271 : vector<8x8xf32> to vector<8x8xbf16>
      %c0_176 = arith.constant 0 : index
      %c1_177 = arith.constant 1 : index
      %c0_178 = arith.constant 0 : index
      %c0_179 = arith.constant 0 : index
      %273 = vector.load %arg17[%c0_176, %c1_177, %c0_178, %c0_179] : memref<2x4x8x8xbf16, #tpu.memory_space<vmem>>, vector<1x1x8x8xbf16>
      %274 = vector.shape_cast %273 : vector<1x1x8x8xbf16> to vector<8x8xbf16>
      %275 = vector.shape_cast %272 : vector<8x8xbf16> to vector<1x1x8x8xbf16>
      tpu.vector_store %arg17[%c0_176, %c1_177, %c0_178, %c0_179], %275 {strides = array<i32>} : memref<2x4x8x8xbf16, #tpu.memory_space<vmem>>, vector<1x1x8x8xbf16>,
      %276 = vector.extract_strided_slice %241 {offsets = [0, 16], sizes = [8, 8], strides = [1, 1]} : vector<16x96xf32> to vector<8x8xf32>
      %cst_180 = arith.constant 0.353553385 : f32
      %277 = vector.broadcast %cst_180 : f32 to vector<8x8xf32>
      %278 = arith.mulf %276, %277 : vector<8x8xf32>
      %279 = arith.truncf %278 : vector<8x8xf32> to vector<8x8xbf16>
      %c0_181 = arith.constant 0 : index
      %c2_182 = arith.constant 2 : index
      %c0_183 = arith.constant 0 : index
      %c0_184 = arith.constant 0 : index
      %280 = vector.load %arg15[%c0_181, %c2_182, %c0_183, %c0_184] : memref<2x4x8x8xbf16, #tpu.memory_space<vmem>>, vector<1x1x8x8xbf16>
      %281 = vector.shape_cast %280 : vector<1x1x8x8xbf16> to vector<8x8xbf16>
      %282 = vector.shape_cast %279 : vector<8x8xbf16> to vector<1x1x8x8xbf16>
      tpu.vector_store %arg15[%c0_181, %c2_182, %c0_183, %c0_184], %282 {strides = array<i32>} : memref<2x4x8x8xbf16, #tpu.memory_space<vmem>>, vector<1x1x8x8xbf16>,
      %283 = vector.extract_strided_slice %241 {offsets = [0, 48], sizes = [8, 8], strides = [1, 1]} : vector<16x96xf32> to vector<8x8xf32>
      %284 = arith.truncf %283 : vector<8x8xf32> to vector<8x8xbf16>
      %c0_185 = arith.constant 0 : index
      %c2_186 = arith.constant 2 : index
      %c0_187 = arith.constant 0 : index
      %c0_188 = arith.constant 0 : index
      %285 = vector.load %arg16[%c0_185, %c2_186, %c0_187, %c0_188] : memref<2x4x8x8xbf16, #tpu.memory_space<vmem>>, vector<1x1x8x8xbf16>
      %286 = vector.shape_cast %285 : vector<1x1x8x8xbf16> to vector<8x8xbf16>
      %287 = vector.shape_cast %284 : vector<8x8xbf16> to vector<1x1x8x8xbf16>
      tpu.vector_store %arg16[%c0_185, %c2_186, %c0_187, %c0_188], %287 {strides = array<i32>} : memref<2x4x8x8xbf16, #tpu.memory_space<vmem>>, vector<1x1x8x8xbf16>,
      %288 = vector.extract_strided_slice %241 {offsets = [0, 80], sizes = [8, 8], strides = [1, 1]} : vector<16x96xf32> to vector<8x8xf32>
      %289 = arith.truncf %288 : vector<8x8xf32> to vector<8x8xbf16>
      %c0_189 = arith.constant 0 : index
      %c2_190 = arith.constant 2 : index
      %c0_191 = arith.constant 0 : index
      %c0_192 = arith.constant 0 : index
      %290 = vector.load %arg17[%c0_189, %c2_190, %c0_191, %c0_192] : memref<2x4x8x8xbf16, #tpu.memory_space<vmem>>, vector<1x1x8x8xbf16>
      %291 = vector.shape_cast %290 : vector<1x1x8x8xbf16> to vector<8x8xbf16>
      %292 = vector.shape_cast %289 : vector<8x8xbf16> to vector<1x1x8x8xbf16>
      tpu.vector_store %arg17[%c0_189, %c2_190, %c0_191, %c0_192], %292 {strides = array<i32>} : memref<2x4x8x8xbf16, #tpu.memory_space<vmem>>, vector<1x1x8x8xbf16>,
      %293 = vector.extract_strided_slice %241 {offsets = [0, 24], sizes = [8, 8], strides = [1, 1]} : vector<16x96xf32> to vector<8x8xf32>
      %cst_193 = arith.constant 0.353553385 : f32
      %294 = vector.broadcast %cst_193 : f32 to vector<8x8xf32>
      %295 = arith.mulf %293, %294 : vector<8x8xf32>
      %296 = arith.truncf %295 : vector<8x8xf32> to vector<8x8xbf16>
      %c0_194 = arith.constant 0 : index
      %c3_195 = arith.constant 3 : index
      %c0_196 = arith.constant 0 : index
      %c0_197 = arith.constant 0 : index
      %297 = vector.load %arg15[%c0_194, %c3_195, %c0_196, %c0_197] : memref<2x4x8x8xbf16, #tpu.memory_space<vmem>>, vector<1x1x8x8xbf16>
      %298 = vector.shape_cast %297 : vector<1x1x8x8xbf16> to vector<8x8xbf16>
      %299 = vector.shape_cast %296 : vector<8x8xbf16> to vector<1x1x8x8xbf16>
      tpu.vector_store %arg15[%c0_194, %c3_195, %c0_196, %c0_197], %299 {strides = array<i32>} : memref<2x4x8x8xbf16, #tpu.memory_space<vmem>>, vector<1x1x8x8xbf16>,
      %300 = vector.extract_strided_slice %241 {offsets = [0, 56], sizes = [8, 8], strides = [1, 1]} : vector<16x96xf32> to vector<8x8xf32>
      %301 = arith.truncf %300 : vector<8x8xf32> to vector<8x8xbf16>
      %c0_198 = arith.constant 0 : index
      %c3_199 = arith.constant 3 : index
      %c0_200 = arith.constant 0 : index
      %c0_201 = arith.constant 0 : index
      %302 = vector.load %arg16[%c0_198, %c3_199, %c0_200, %c0_201] : memref<2x4x8x8xbf16, #tpu.memory_space<vmem>>, vector<1x1x8x8xbf16>
      %303 = vector.shape_cast %302 : vector<1x1x8x8xbf16> to vector<8x8xbf16>
      %304 = vector.shape_cast %301 : vector<8x8xbf16> to vector<1x1x8x8xbf16>
      tpu.vector_store %arg16[%c0_198, %c3_199, %c0_200, %c0_201], %304 {strides = array<i32>} : memref<2x4x8x8xbf16, #tpu.memory_space<vmem>>, vector<1x1x8x8xbf16>,
      %305 = vector.extract_strided_slice %241 {offsets = [0, 88], sizes = [8, 8], strides = [1, 1]} : vector<16x96xf32> to vector<8x8xf32>
      %306 = arith.truncf %305 : vector<8x8xf32> to vector<8x8xbf16>
      %c0_202 = arith.constant 0 : index
      %c3_203 = arith.constant 3 : index
      %c0_204 = arith.constant 0 : index
      %c0_205 = arith.constant 0 : index
      %307 = vector.load %arg17[%c0_202, %c3_203, %c0_204, %c0_205] : memref<2x4x8x8xbf16, #tpu.memory_space<vmem>>, vector<1x1x8x8xbf16>
      %308 = vector.shape_cast %307 : vector<1x1x8x8xbf16> to vector<8x8xbf16>
      %309 = vector.shape_cast %306 : vector<8x8xbf16> to vector<1x1x8x8xbf16>
      tpu.vector_store %arg17[%c0_202, %c3_203, %c0_204, %c0_205], %309 {strides = array<i32>} : memref<2x4x8x8xbf16, #tpu.memory_space<vmem>>, vector<1x1x8x8xbf16>,
      %310 = vector.extract_strided_slice %241 {offsets = [8, 0], sizes = [8, 8], strides = [1, 1]} : vector<16x96xf32> to vector<8x8xf32>
      %cst_206 = arith.constant 0.353553385 : f32
      %311 = vector.broadcast %cst_206 : f32 to vector<8x8xf32>
      %312 = arith.mulf %310, %311 : vector<8x8xf32>
      %313 = arith.truncf %312 : vector<8x8xf32> to vector<8x8xbf16>
      %c1_207 = arith.constant 1 : index
      %c0_208 = arith.constant 0 : index
      %c0_209 = arith.constant 0 : index
      %c0_210 = arith.constant 0 : index
      %314 = vector.load %arg15[%c1_207, %c0_208, %c0_209, %c0_210] : memref<2x4x8x8xbf16, #tpu.memory_space<vmem>>, vector<1x1x8x8xbf16>
      %315 = vector.shape_cast %314 : vector<1x1x8x8xbf16> to vector<8x8xbf16>
      %316 = vector.shape_cast %313 : vector<8x8xbf16> to vector<1x1x8x8xbf16>
      tpu.vector_store %arg15[%c1_207, %c0_208, %c0_209, %c0_210], %316 {strides = array<i32>} : memref<2x4x8x8xbf16, #tpu.memory_space<vmem>>, vector<1x1x8x8xbf16>,
      %317 = vector.extract_strided_slice %241 {offsets = [8, 32], sizes = [8, 8], strides = [1, 1]} : vector<16x96xf32> to vector<8x8xf32>
      %318 = arith.truncf %317 : vector<8x8xf32> to vector<8x8xbf16>
      %c1_211 = arith.constant 1 : index
      %c0_212 = arith.constant 0 : index
      %c0_213 = arith.constant 0 : index
      %c0_214 = arith.constant 0 : index
      %319 = vector.load %arg16[%c1_211, %c0_212, %c0_213, %c0_214] : memref<2x4x8x8xbf16, #tpu.memory_space<vmem>>, vector<1x1x8x8xbf16>
      %320 = vector.shape_cast %319 : vector<1x1x8x8xbf16> to vector<8x8xbf16>
      %321 = vector.shape_cast %318 : vector<8x8xbf16> to vector<1x1x8x8xbf16>
      tpu.vector_store %arg16[%c1_211, %c0_212, %c0_213, %c0_214], %321 {strides = array<i32>} : memref<2x4x8x8xbf16, #tpu.memory_space<vmem>>, vector<1x1x8x8xbf16>,
      %322 = vector.extract_strided_slice %241 {offsets = [8, 64], sizes = [8, 8], strides = [1, 1]} : vector<16x96xf32> to vector<8x8xf32>
      %323 = arith.truncf %322 : vector<8x8xf32> to vector<8x8xbf16>
      %c1_215 = arith.constant 1 : index
      %c0_216 = arith.constant 0 : index
      %c0_217 = arith.constant 0 : index
      %c0_218 = arith.constant 0 : index
      %324 = vector.load %arg17[%c1_215, %c0_216, %c0_217, %c0_218] : memref<2x4x8x8xbf16, #tpu.memory_space<vmem>>, vector<1x1x8x8xbf16>
      %325 = vector.shape_cast %324 : vector<1x1x8x8xbf16> to vector<8x8xbf16>
      %326 = vector.shape_cast %323 : vector<8x8xbf16> to vector<1x1x8x8xbf16>
      tpu.vector_store %arg17[%c1_215, %c0_216, %c0_217, %c0_218], %326 {strides = array<i32>} : memref<2x4x8x8xbf16, #tpu.memory_space<vmem>>, vector<1x1x8x8xbf16>,
      %327 = vector.extract_strided_slice %241 {offsets = [8, 8], sizes = [8, 8], strides = [1, 1]} : vector<16x96xf32> to vector<8x8xf32>
      %cst_219 = arith.constant 0.353553385 : f32
      %328 = vector.broadcast %cst_219 : f32 to vector<8x8xf32>
      %329 = arith.mulf %327, %328 : vector<8x8xf32>
      %330 = arith.truncf %329 : vector<8x8xf32> to vector<8x8xbf16>
      %c1_220 = arith.constant 1 : index
      %c1_221 = arith.constant 1 : index
      %c0_222 = arith.constant 0 : index
      %c0_223 = arith.constant 0 : index
      %331 = vector.load %arg15[%c1_220, %c1_221, %c0_222, %c0_223] : memref<2x4x8x8xbf16, #tpu.memory_space<vmem>>, vector<1x1x8x8xbf16>
      %332 = vector.shape_cast %331 : vector<1x1x8x8xbf16> to vector<8x8xbf16>
      %333 = vector.shape_cast %330 : vector<8x8xbf16> to vector<1x1x8x8xbf16>
      tpu.vector_store %arg15[%c1_220, %c1_221, %c0_222, %c0_223], %333 {strides = array<i32>} : memref<2x4x8x8xbf16, #tpu.memory_space<vmem>>, vector<1x1x8x8xbf16>,
      %334 = vector.extract_strided_slice %241 {offsets = [8, 40], sizes = [8, 8], strides = [1, 1]} : vector<16x96xf32> to vector<8x8xf32>
      %335 = arith.truncf %334 : vector<8x8xf32> to vector<8x8xbf16>
      %c1_224 = arith.constant 1 : index
      %c1_225 = arith.constant 1 : index
      %c0_226 = arith.constant 0 : index
      %c0_227 = arith.constant 0 : index
      %336 = vector.load %arg16[%c1_224, %c1_225, %c0_226, %c0_227] : memref<2x4x8x8xbf16, #tpu.memory_space<vmem>>, vector<1x1x8x8xbf16>
      %337 = vector.shape_cast %336 : vector<1x1x8x8xbf16> to vector<8x8xbf16>
      %338 = vector.shape_cast %335 : vector<8x8xbf16> to vector<1x1x8x8xbf16>
      tpu.vector_store %arg16[%c1_224, %c1_225, %c0_226, %c0_227], %338 {strides = array<i32>} : memref<2x4x8x8xbf16, #tpu.memory_space<vmem>>, vector<1x1x8x8xbf16>,
      %339 = vector.extract_strided_slice %241 {offsets = [8, 72], sizes = [8, 8], strides = [1, 1]} : vector<16x96xf32> to vector<8x8xf32>
      %340 = arith.truncf %339 : vector<8x8xf32> to vector<8x8xbf16>
      %c1_228 = arith.constant 1 : index
      %c1_229 = arith.constant 1 : index
      %c0_230 = arith.constant 0 : index
      %c0_231 = arith.constant 0 : index
      %341 = vector.load %arg17[%c1_228, %c1_229, %c0_230, %c0_231] : memref<2x4x8x8xbf16, #tpu.memory_space<vmem>>, vector<1x1x8x8xbf16>
      %342 = vector.shape_cast %341 : vector<1x1x8x8xbf16> to vector<8x8xbf16>
      %343 = vector.shape_cast %340 : vector<8x8xbf16> to vector<1x1x8x8xbf16>
      tpu.vector_store %arg17[%c1_228, %c1_229, %c0_230, %c0_231], %343 {strides = array<i32>} : memref<2x4x8x8xbf16, #tpu.memory_space<vmem>>, vector<1x1x8x8xbf16>,
      %344 = vector.extract_strided_slice %241 {offsets = [8, 16], sizes = [8, 8], strides = [1, 1]} : vector<16x96xf32> to vector<8x8xf32>
      %cst_232 = arith.constant 0.353553385 : f32
      %345 = vector.broadcast %cst_232 : f32 to vector<8x8xf32>
      %346 = arith.mulf %344, %345 : vector<8x8xf32>
      %347 = arith.truncf %346 : vector<8x8xf32> to vector<8x8xbf16>
      %c1_233 = arith.constant 1 : index
      %c2_234 = arith.constant 2 : index
      %c0_235 = arith.constant 0 : index
      %c0_236 = arith.constant 0 : index
      %348 = vector.load %arg15[%c1_233, %c2_234, %c0_235, %c0_236] : memref<2x4x8x8xbf16, #tpu.memory_space<vmem>>, vector<1x1x8x8xbf16>
      %349 = vector.shape_cast %348 : vector<1x1x8x8xbf16> to vector<8x8xbf16>
      %350 = vector.shape_cast %347 : vector<8x8xbf16> to vector<1x1x8x8xbf16>
      tpu.vector_store %arg15[%c1_233, %c2_234, %c0_235, %c0_236], %350 {strides = array<i32>} : memref<2x4x8x8xbf16, #tpu.memory_space<vmem>>, vector<1x1x8x8xbf16>,
      %351 = vector.extract_strided_slice %241 {offsets = [8, 48], sizes = [8, 8], strides = [1, 1]} : vector<16x96xf32> to vector<8x8xf32>
      %352 = arith.truncf %351 : vector<8x8xf32> to vector<8x8xbf16>
      %c1_237 = arith.constant 1 : index
      %c2_238 = arith.constant 2 : index
      %c0_239 = arith.constant 0 : index
      %c0_240 = arith.constant 0 : index
      %353 = vector.load %arg16[%c1_237, %c2_238, %c0_239, %c0_240] : memref<2x4x8x8xbf16, #tpu.memory_space<vmem>>, vector<1x1x8x8xbf16>
      %354 = vector.shape_cast %353 : vector<1x1x8x8xbf16> to vector<8x8xbf16>
      %355 = vector.shape_cast %352 : vector<8x8xbf16> to vector<1x1x8x8xbf16>
      tpu.vector_store %arg16[%c1_237, %c2_238, %c0_239, %c0_240], %355 {strides = array<i32>} : memref<2x4x8x8xbf16, #tpu.memory_space<vmem>>, vector<1x1x8x8xbf16>,
      %356 = vector.extract_strided_slice %241 {offsets = [8, 80], sizes = [8, 8], strides = [1, 1]} : vector<16x96xf32> to vector<8x8xf32>
      %357 = arith.truncf %356 : vector<8x8xf32> to vector<8x8xbf16>
      %c1_241 = arith.constant 1 : index
      %c2_242 = arith.constant 2 : index
      %c0_243 = arith.constant 0 : index
      %c0_244 = arith.constant 0 : index
      %358 = vector.load %arg17[%c1_241, %c2_242, %c0_243, %c0_244] : memref<2x4x8x8xbf16, #tpu.memory_space<vmem>>, vector<1x1x8x8xbf16>
      %359 = vector.shape_cast %358 : vector<1x1x8x8xbf16> to vector<8x8xbf16>
      %360 = vector.shape_cast %357 : vector<8x8xbf16> to vector<1x1x8x8xbf16>
      tpu.vector_store %arg17[%c1_241, %c2_242, %c0_243, %c0_244], %360 {strides = array<i32>} : memref<2x4x8x8xbf16, #tpu.memory_space<vmem>>, vector<1x1x8x8xbf16>,
      %361 = vector.extract_strided_slice %241 {offsets = [8, 24], sizes = [8, 8], strides = [1, 1]} : vector<16x96xf32> to vector<8x8xf32>
      %cst_245 = arith.constant 0.353553385 : f32
      %362 = vector.broadcast %cst_245 : f32 to vector<8x8xf32>
      %363 = arith.mulf %361, %362 : vector<8x8xf32>
      %364 = arith.truncf %363 : vector<8x8xf32> to vector<8x8xbf16>
      %c1_246 = arith.constant 1 : index
      %c3_247 = arith.constant 3 : index
      %c0_248 = arith.constant 0 : index
      %c0_249 = arith.constant 0 : index
      %365 = vector.load %arg15[%c1_246, %c3_247, %c0_248, %c0_249] : memref<2x4x8x8xbf16, #tpu.memory_space<vmem>>, vector<1x1x8x8xbf16>
      %366 = vector.shape_cast %365 : vector<1x1x8x8xbf16> to vector<8x8xbf16>
      %367 = vector.shape_cast %364 : vector<8x8xbf16> to vector<1x1x8x8xbf16>
      tpu.vector_store %arg15[%c1_246, %c3_247, %c0_248, %c0_249], %367 {strides = array<i32>} : memref<2x4x8x8xbf16, #tpu.memory_space<vmem>>, vector<1x1x8x8xbf16>,
      %368 = vector.extract_strided_slice %241 {offsets = [8, 56], sizes = [8, 8], strides = [1, 1]} : vector<16x96xf32> to vector<8x8xf32>
      %369 = arith.truncf %368 : vector<8x8xf32> to vector<8x8xbf16>
      %c1_250 = arith.constant 1 : index
      %c3_251 = arith.constant 3 : index
      %c0_252 = arith.constant 0 : index
      %c0_253 = arith.constant 0 : index
      %370 = vector.load %arg16[%c1_250, %c3_251, %c0_252, %c0_253] : memref<2x4x8x8xbf16, #tpu.memory_space<vmem>>, vector<1x1x8x8xbf16>
      %371 = vector.shape_cast %370 : vector<1x1x8x8xbf16> to vector<8x8xbf16>
      %372 = vector.shape_cast %369 : vector<8x8xbf16> to vector<1x1x8x8xbf16>
      tpu.vector_store %arg16[%c1_250, %c3_251, %c0_252, %c0_253], %372 {strides = array<i32>} : memref<2x4x8x8xbf16, #tpu.memory_space<vmem>>, vector<1x1x8x8xbf16>,
      %373 = vector.extract_strided_slice %241 {offsets = [8, 88], sizes = [8, 8], strides = [1, 1]} : vector<16x96xf32> to vector<8x8xf32>
      %374 = arith.truncf %373 : vector<8x8xf32> to vector<8x8xbf16>
      %c1_254 = arith.constant 1 : index
      %c3_255 = arith.constant 3 : index
      %c0_256 = arith.constant 0 : index
      %c0_257 = arith.constant 0 : index
      %375 = vector.load %arg17[%c1_254, %c3_255, %c0_256, %c0_257] : memref<2x4x8x8xbf16, #tpu.memory_space<vmem>>, vector<1x1x8x8xbf16>
      %376 = vector.shape_cast %375 : vector<1x1x8x8xbf16> to vector<8x8xbf16>
      %377 = vector.shape_cast %374 : vector<8x8xbf16> to vector<1x1x8x8xbf16>
      tpu.vector_store %arg17[%c1_254, %c3_255, %c0_256, %c0_257], %377 {strides = array<i32>} : memref<2x4x8x8xbf16, #tpu.memory_space<vmem>>, vector<1x1x8x8xbf16>,
      %cst_258 = arith.constant 0.000000e+00 : f32
      %378 = vector.broadcast %cst_258 : f32 to vector<16x32xf32>
      %c0_259 = arith.constant 0 : index
      %c0_260 = arith.constant 0 : index
      %379 = vector.load %arg18[%c0_259, %c0_260] : memref<16x32xf32, #tpu.memory_space<vmem>>, vector<16x32xf32>
      tpu.vector_store %arg18[%c0_259, %c0_260], %378 {strides = array<i32>} : memref<16x32xf32, #tpu.memory_space<vmem>>, vector<16x32xf32>,
    } else {
    }
    %c4_i32 = arith.constant 4 : i32
    %3 = arith.muli %arg1, %c4_i32 : i32
    %c0_i32_1 = arith.constant 0 : i32
    %4 = arith.addi %3, %c0_i32_1 : i32
    %c0 = arith.constant 0 : index
    %5 = arith.index_cast %4 : i32 to index
    %c0_2 = arith.constant 0 : index
    %c0_3 = arith.constant 0 : index
    %6 = vector.load %arg15[%c0, %5, %c0_2, %c0_3] : memref<2x4x8x8xbf16, #tpu.memory_space<vmem>>, vector<1x1x8x8xbf16>
    %7 = vector.shape_cast %6 : vector<1x1x8x8xbf16> to vector<8x8xbf16>
    %c0_4 = arith.constant 0 : index
    %8 = arith.index_cast %4 : i32 to index
    %c0_5 = arith.constant 0 : index
    %c0_6 = arith.constant 0 : index
    %9 = vector.load %arg16[%c0_4, %8, %c0_5, %c0_6] : memref<2x4x8x8xbf16, #tpu.memory_space<vmem>>, vector<1x1x8x8xbf16>
    %10 = vector.shape_cast %9 : vector<1x1x8x8xbf16> to vector<8x8xbf16>
    %c0_7 = arith.constant 0 : index
    %11 = arith.index_cast %4 : i32 to index
    %c0_8 = arith.constant 0 : index
    %c0_9 = arith.constant 0 : index
    %12 = vector.load %arg17[%c0_7, %11, %c0_8, %c0_9] : memref<2x4x8x8xbf16, #tpu.memory_space<vmem>>, vector<1x1x8x8xbf16>
    %13 = vector.shape_cast %12 : vector<1x1x8x8xbf16> to vector<8x8xbf16>
    %cst = arith.constant dense<0.000000e+00> : vector<8x8xf32>
    %14 = tpu.matmul %7, %10, %cst {dimension_numbers = #tpu.dot_dimension_numbers<[1], [1], [0], [0], [0, 0, 1, 0], [], []>} : vector<8x8xbf16>, vector<8x8xbf16>, vector<8x8xf32> -> vector<8x8xf32>
    %cst_10 = arith.constant dense<0xFF800000> : vector<8xf32>
    %15 = vector.multi_reduction <maximumf>, %14, %cst_10 [1] : vector<8x8xf32> to vector<8xf32>
    %16 = vector.shape_cast %15 : vector<8xf32> to vector<8x1xf32>
    %17 = vector.broadcast %16 : vector<8x1xf32> to vector<8x8xf32>
    %18 = arith.subf %14, %17 : vector<8x8xf32>
    %19 = math.exp %18 : vector<8x8xf32>
    %cst_11 = arith.constant dense<0.000000e+00> : vector<8xf32>
    %20 = vector.multi_reduction <add>, %19, %cst_11 [1] : vector<8x8xf32> to vector<8xf32>
    %21 = vector.shape_cast %20 : vector<8xf32> to vector<8x1xf32>
    %22 = tpu.reciprocal %21 {approx = true} : vector<8x1xf32> -> vector<8x1xf32>
    %23 = vector.broadcast %22 : vector<8x1xf32> to vector<8x8xf32>
    %24 = arith.mulf %19, %23 : vector<8x8xf32>
    %25 = arith.truncf %24 : vector<8x8xf32> to vector<8x8xbf16>
    %c0_12 = arith.constant 0 : index
    %c0_13 = arith.constant 0 : index
    %c0_14 = arith.constant 0 : index
    %c0_15 = arith.constant 0 : index
    %26 = vector.load %arg14[%c0_12, %c0_13, %c0_14, %c0_15] : memref<2x4x8x8xbf16, #tpu.memory_space<vmem>>, vector<1x1x8x8xbf16>
    %27 = vector.shape_cast %26 : vector<1x1x8x8xbf16> to vector<8x8xbf16>
    %28 = vector.shape_cast %25 : vector<8x8xbf16> to vector<1x1x8x8xbf16>
    tpu.vector_store %arg14[%c0_12, %c0_13, %c0_14, %c0_15], %28 {strides = array<i32>} : memref<2x4x8x8xbf16, #tpu.memory_space<vmem>>, vector<1x1x8x8xbf16>,
    %29 = arith.truncf %24 : vector<8x8xf32> to vector<8x8xbf16>
    %cst_16 = arith.constant dense<0.000000e+00> : vector<8x8xf32>
    %30 = tpu.matmul %29, %13, %cst_16 {dimension_numbers = #tpu.dot_dimension_numbers<[1], [0], [0], [1], [0, 0, 1, 1], [], []>} : vector<8x8xbf16>, vector<8x8xbf16>, vector<8x8xf32> -> vector<8x8xf32>
    %c1_i32 = arith.constant 1 : i32
    %31 = arith.addi %3, %c1_i32 : i32
    %c0_17 = arith.constant 0 : index
    %32 = arith.index_cast %31 : i32 to index
    %c0_18 = arith.constant 0 : index
    %c0_19 = arith.constant 0 : index
    %33 = vector.load %arg15[%c0_17, %32, %c0_18, %c0_19] : memref<2x4x8x8xbf16, #tpu.memory_space<vmem>>, vector<1x1x8x8xbf16>
    %34 = vector.shape_cast %33 : vector<1x1x8x8xbf16> to vector<8x8xbf16>
    %c0_20 = arith.constant 0 : index
    %35 = arith.index_cast %31 : i32 to index
    %c0_21 = arith.constant 0 : index
    %c0_22 = arith.constant 0 : index
    %36 = vector.load %arg16[%c0_20, %35, %c0_21, %c0_22] : memref<2x4x8x8xbf16, #tpu.memory_space<vmem>>, vector<1x1x8x8xbf16>
    %37 = vector.shape_cast %36 : vector<1x1x8x8xbf16> to vector<8x8xbf16>
    %c0_23 = arith.constant 0 : index
    %38 = arith.index_cast %31 : i32 to index
    %c0_24 = arith.constant 0 : index
    %c0_25 = arith.constant 0 : index
    %39 = vector.load %arg17[%c0_23, %38, %c0_24, %c0_25] : memref<2x4x8x8xbf16, #tpu.memory_space<vmem>>, vector<1x1x8x8xbf16>
    %40 = vector.shape_cast %39 : vector<1x1x8x8xbf16> to vector<8x8xbf16>
    %cst_26 = arith.constant dense<0.000000e+00> : vector<8x8xf32>
    %41 = tpu.matmul %34, %37, %cst_26 {dimension_numbers = #tpu.dot_dimension_numbers<[1], [1], [0], [0], [0, 0, 1, 0], [], []>} : vector<8x8xbf16>, vector<8x8xbf16>, vector<8x8xf32> -> vector<8x8xf32>
    %cst_27 = arith.constant dense<0xFF800000> : vector<8xf32>
    %42 = vector.multi_reduction <maximumf>, %41, %cst_27 [1] : vector<8x8xf32> to vector<8xf32>
    %43 = vector.shape_cast %42 : vector<8xf32> to vector<8x1xf32>
    %44 = vector.broadcast %43 : vector<8x1xf32> to vector<8x8xf32>
    %45 = arith.subf %41, %44 : vector<8x8xf32>
    %46 = math.exp %45 : vector<8x8xf32>
    %cst_28 = arith.constant dense<0.000000e+00> : vector<8xf32>
    %47 = vector.multi_reduction <add>, %46, %cst_28 [1] : vector<8x8xf32> to vector<8xf32>
    %48 = vector.shape_cast %47 : vector<8xf32> to vector<8x1xf32>
    %49 = tpu.reciprocal %48 {approx = true} : vector<8x1xf32> -> vector<8x1xf32>
    %50 = vector.broadcast %49 : vector<8x1xf32> to vector<8x8xf32>
    %51 = arith.mulf %46, %50 : vector<8x8xf32>
    %52 = arith.truncf %51 : vector<8x8xf32> to vector<8x8xbf16>
    %c0_29 = arith.constant 0 : index
    %c1 = arith.constant 1 : index
    %c0_30 = arith.constant 0 : index
    %c0_31 = arith.constant 0 : index
    %53 = vector.load %arg14[%c0_29, %c1, %c0_30, %c0_31] : memref<2x4x8x8xbf16, #tpu.memory_space<vmem>>, vector<1x1x8x8xbf16>
    %54 = vector.shape_cast %53 : vector<1x1x8x8xbf16> to vector<8x8xbf16>
    %55 = vector.shape_cast %52 : vector<8x8xbf16> to vector<1x1x8x8xbf16>
    tpu.vector_store %arg14[%c0_29, %c1, %c0_30, %c0_31], %55 {strides = array<i32>} : memref<2x4x8x8xbf16, #tpu.memory_space<vmem>>, vector<1x1x8x8xbf16>,
    %56 = arith.truncf %51 : vector<8x8xf32> to vector<8x8xbf16>
    %cst_32 = arith.constant dense<0.000000e+00> : vector<8x8xf32>
    %57 = tpu.matmul %56, %40, %cst_32 {dimension_numbers = #tpu.dot_dimension_numbers<[1], [0], [0], [1], [0, 0, 1, 1], [], []>} : vector<8x8xbf16>, vector<8x8xbf16>, vector<8x8xf32> -> vector<8x8xf32>
    %c2_i32 = arith.constant 2 : i32
    %58 = arith.addi %3, %c2_i32 : i32
    %c0_33 = arith.constant 0 : index
    %59 = arith.index_cast %58 : i32 to index
    %c0_34 = arith.constant 0 : index
    %c0_35 = arith.constant 0 : index
    %60 = vector.load %arg15[%c0_33, %59, %c0_34, %c0_35] : memref<2x4x8x8xbf16, #tpu.memory_space<vmem>>, vector<1x1x8x8xbf16>
    %61 = vector.shape_cast %60 : vector<1x1x8x8xbf16> to vector<8x8xbf16>
    %c0_36 = arith.constant 0 : index
    %62 = arith.index_cast %58 : i32 to index
    %c0_37 = arith.constant 0 : index
    %c0_38 = arith.constant 0 : index
    %63 = vector.load %arg16[%c0_36, %62, %c0_37, %c0_38] : memref<2x4x8x8xbf16, #tpu.memory_space<vmem>>, vector<1x1x8x8xbf16>
    %64 = vector.shape_cast %63 : vector<1x1x8x8xbf16> to vector<8x8xbf16>
    %c0_39 = arith.constant 0 : index
    %65 = arith.index_cast %58 : i32 to index
    %c0_40 = arith.constant 0 : index
    %c0_41 = arith.constant 0 : index
    %66 = vector.load %arg17[%c0_39, %65, %c0_40, %c0_41] : memref<2x4x8x8xbf16, #tpu.memory_space<vmem>>, vector<1x1x8x8xbf16>
    %67 = vector.shape_cast %66 : vector<1x1x8x8xbf16> to vector<8x8xbf16>
    %cst_42 = arith.constant dense<0.000000e+00> : vector<8x8xf32>
    %68 = tpu.matmul %61, %64, %cst_42 {dimension_numbers = #tpu.dot_dimension_numbers<[1], [1], [0], [0], [0, 0, 1, 0], [], []>} : vector<8x8xbf16>, vector<8x8xbf16>, vector<8x8xf32> -> vector<8x8xf32>
    %cst_43 = arith.constant dense<0xFF800000> : vector<8xf32>
    %69 = vector.multi_reduction <maximumf>, %68, %cst_43 [1] : vector<8x8xf32> to vector<8xf32>
    %70 = vector.shape_cast %69 : vector<8xf32> to vector<8x1xf32>
    %71 = vector.broadcast %70 : vector<8x1xf32> to vector<8x8xf32>
    %72 = arith.subf %68, %71 : vector<8x8xf32>
    %73 = math.exp %72 : vector<8x8xf32>
    %cst_44 = arith.constant dense<0.000000e+00> : vector<8xf32>
    %74 = vector.multi_reduction <add>, %73, %cst_44 [1] : vector<8x8xf32> to vector<8xf32>
    %75 = vector.shape_cast %74 : vector<8xf32> to vector<8x1xf32>
    %76 = tpu.reciprocal %75 {approx = true} : vector<8x1xf32> -> vector<8x1xf32>
    %77 = vector.broadcast %76 : vector<8x1xf32> to vector<8x8xf32>
    %78 = arith.mulf %73, %77 : vector<8x8xf32>
    %79 = arith.truncf %78 : vector<8x8xf32> to vector<8x8xbf16>
    %c0_45 = arith.constant 0 : index
    %c2 = arith.constant 2 : index
    %c0_46 = arith.constant 0 : index
    %c0_47 = arith.constant 0 : index
    %80 = vector.load %arg14[%c0_45, %c2, %c0_46, %c0_47] : memref<2x4x8x8xbf16, #tpu.memory_space<vmem>>, vector<1x1x8x8xbf16>
    %81 = vector.shape_cast %80 : vector<1x1x8x8xbf16> to vector<8x8xbf16>
    %82 = vector.shape_cast %79 : vector<8x8xbf16> to vector<1x1x8x8xbf16>
    tpu.vector_store %arg14[%c0_45, %c2, %c0_46, %c0_47], %82 {strides = array<i32>} : memref<2x4x8x8xbf16, #tpu.memory_space<vmem>>, vector<1x1x8x8xbf16>,
    %83 = arith.truncf %78 : vector<8x8xf32> to vector<8x8xbf16>
    %cst_48 = arith.constant dense<0.000000e+00> : vector<8x8xf32>
    %84 = tpu.matmul %83, %67, %cst_48 {dimension_numbers = #tpu.dot_dimension_numbers<[1], [0], [0], [1], [0, 0, 1, 1], [], []>} : vector<8x8xbf16>, vector<8x8xbf16>, vector<8x8xf32> -> vector<8x8xf32>
    %c3_i32 = arith.constant 3 : i32
    %85 = arith.addi %3, %c3_i32 : i32
    %c0_49 = arith.constant 0 : index
    %86 = arith.index_cast %85 : i32 to index
    %c0_50 = arith.constant 0 : index
    %c0_51 = arith.constant 0 : index
    %87 = vector.load %arg15[%c0_49, %86, %c0_50, %c0_51] : memref<2x4x8x8xbf16, #tpu.memory_space<vmem>>, vector<1x1x8x8xbf16>
    %88 = vector.shape_cast %87 : vector<1x1x8x8xbf16> to vector<8x8xbf16>
    %c0_52 = arith.constant 0 : index
    %89 = arith.index_cast %85 : i32 to index
    %c0_53 = arith.constant 0 : index
    %c0_54 = arith.constant 0 : index
    %90 = vector.load %arg16[%c0_52, %89, %c0_53, %c0_54] : memref<2x4x8x8xbf16, #tpu.memory_space<vmem>>, vector<1x1x8x8xbf16>
    %91 = vector.shape_cast %90 : vector<1x1x8x8xbf16> to vector<8x8xbf16>
    %c0_55 = arith.constant 0 : index
    %92 = arith.index_cast %85 : i32 to index
    %c0_56 = arith.constant 0 : index
    %c0_57 = arith.constant 0 : index
    %93 = vector.load %arg17[%c0_55, %92, %c0_56, %c0_57] : memref<2x4x8x8xbf16, #tpu.memory_space<vmem>>, vector<1x1x8x8xbf16>
    %94 = vector.shape_cast %93 : vector<1x1x8x8xbf16> to vector<8x8xbf16>
    %cst_58 = arith.constant dense<0.000000e+00> : vector<8x8xf32>
    %95 = tpu.matmul %88, %91, %cst_58 {dimension_numbers = #tpu.dot_dimension_numbers<[1], [1], [0], [0], [0, 0, 1, 0], [], []>} : vector<8x8xbf16>, vector<8x8xbf16>, vector<8x8xf32> -> vector<8x8xf32>
    %cst_59 = arith.constant dense<0xFF800000> : vector<8xf32>
    %96 = vector.multi_reduction <maximumf>, %95, %cst_59 [1] : vector<8x8xf32> to vector<8xf32>
    %97 = vector.shape_cast %96 : vector<8xf32> to vector<8x1xf32>
    %98 = vector.broadcast %97 : vector<8x1xf32> to vector<8x8xf32>
    %99 = arith.subf %95, %98 : vector<8x8xf32>
    %100 = math.exp %99 : vector<8x8xf32>
    %cst_60 = arith.constant dense<0.000000e+00> : vector<8xf32>
    %101 = vector.multi_reduction <add>, %100, %cst_60 [1] : vector<8x8xf32> to vector<8xf32>
    %102 = vector.shape_cast %101 : vector<8xf32> to vector<8x1xf32>
    %103 = tpu.reciprocal %102 {approx = true} : vector<8x1xf32> -> vector<8x1xf32>
    %104 = vector.broadcast %103 : vector<8x1xf32> to vector<8x8xf32>
    %105 = arith.mulf %100, %104 : vector<8x8xf32>
    %106 = arith.truncf %105 : vector<8x8xf32> to vector<8x8xbf16>
    %c0_61 = arith.constant 0 : index
    %c3 = arith.constant 3 : index
    %c0_62 = arith.constant 0 : index
    %c0_63 = arith.constant 0 : index
    %107 = vector.load %arg14[%c0_61, %c3, %c0_62, %c0_63] : memref<2x4x8x8xbf16, #tpu.memory_space<vmem>>, vector<1x1x8x8xbf16>
    %108 = vector.shape_cast %107 : vector<1x1x8x8xbf16> to vector<8x8xbf16>
    %109 = vector.shape_cast %106 : vector<8x8xbf16> to vector<1x1x8x8xbf16>
    tpu.vector_store %arg14[%c0_61, %c3, %c0_62, %c0_63], %109 {strides = array<i32>} : memref<2x4x8x8xbf16, #tpu.memory_space<vmem>>, vector<1x1x8x8xbf16>,
    %110 = arith.truncf %105 : vector<8x8xf32> to vector<8x8xbf16>
    %cst_64 = arith.constant dense<0.000000e+00> : vector<8x8xf32>
    %111 = tpu.matmul %110, %94, %cst_64 {dimension_numbers = #tpu.dot_dimension_numbers<[1], [0], [0], [1], [0, 0, 1, 1], [], []>} : vector<8x8xbf16>, vector<8x8xbf16>, vector<8x8xf32> -> vector<8x8xf32>
    %112 = tpu.concatenate %30, %57, %84, %111 in 1 : vector<8x8xf32>, vector<8x8xf32>, vector<8x8xf32>, vector<8x8xf32> -> vector<8x32xf32>
    %c0_i32_65 = arith.constant 0 : i32
    %113 = arith.addi %3, %c0_i32_65 : i32
    %c1_66 = arith.constant 1 : index
    %114 = arith.index_cast %113 : i32 to index
    %c0_67 = arith.constant 0 : index
    %c0_68 = arith.constant 0 : index
    %115 = vector.load %arg15[%c1_66, %114, %c0_67, %c0_68] : memref<2x4x8x8xbf16, #tpu.memory_space<vmem>>, vector<1x1x8x8xbf16>
    %116 = vector.shape_cast %115 : vector<1x1x8x8xbf16> to vector<8x8xbf16>
    %c1_69 = arith.constant 1 : index
    %117 = arith.index_cast %113 : i32 to index
    %c0_70 = arith.constant 0 : index
    %c0_71 = arith.constant 0 : index
    %118 = vector.load %arg16[%c1_69, %117, %c0_70, %c0_71] : memref<2x4x8x8xbf16, #tpu.memory_space<vmem>>, vector<1x1x8x8xbf16>
    %119 = vector.shape_cast %118 : vector<1x1x8x8xbf16> to vector<8x8xbf16>
    %c1_72 = arith.constant 1 : index
    %120 = arith.index_cast %113 : i32 to index
    %c0_73 = arith.constant 0 : index
    %c0_74 = arith.constant 0 : index
    %121 = vector.load %arg17[%c1_72, %120, %c0_73, %c0_74] : memref<2x4x8x8xbf16, #tpu.memory_space<vmem>>, vector<1x1x8x8xbf16>
    %122 = vector.shape_cast %121 : vector<1x1x8x8xbf16> to vector<8x8xbf16>
    %cst_75 = arith.constant dense<0.000000e+00> : vector<8x8xf32>
    %123 = tpu.matmul %116, %119, %cst_75 {dimension_numbers = #tpu.dot_dimension_numbers<[1], [1], [0], [0], [0, 0, 1, 0], [], []>} : vector<8x8xbf16>, vector<8x8xbf16>, vector<8x8xf32> -> vector<8x8xf32>
    %cst_76 = arith.constant dense<0xFF800000> : vector<8xf32>
    %124 = vector.multi_reduction <maximumf>, %123, %cst_76 [1] : vector<8x8xf32> to vector<8xf32>
    %125 = vector.shape_cast %124 : vector<8xf32> to vector<8x1xf32>
    %126 = vector.broadcast %125 : vector<8x1xf32> to vector<8x8xf32>
    %127 = arith.subf %123, %126 : vector<8x8xf32>
    %128 = math.exp %127 : vector<8x8xf32>
    %cst_77 = arith.constant dense<0.000000e+00> : vector<8xf32>
    %129 = vector.multi_reduction <add>, %128, %cst_77 [1] : vector<8x8xf32> to vector<8xf32>
    %130 = vector.shape_cast %129 : vector<8xf32> to vector<8x1xf32>
    %131 = tpu.reciprocal %130 {approx = true} : vector<8x1xf32> -> vector<8x1xf32>
    %132 = vector.broadcast %131 : vector<8x1xf32> to vector<8x8xf32>
    %133 = arith.mulf %128, %132 : vector<8x8xf32>
    %134 = arith.truncf %133 : vector<8x8xf32> to vector<8x8xbf16>
    %c1_78 = arith.constant 1 : index
    %c0_79 = arith.constant 0 : index
    %c0_80 = arith.constant 0 : index
    %c0_81 = arith.constant 0 : index
    %135 = vector.load %arg14[%c1_78, %c0_79, %c0_80, %c0_81] : memref<2x4x8x8xbf16, #tpu.memory_space<vmem>>, vector<1x1x8x8xbf16>
    %136 = vector.shape_cast %135 : vector<1x1x8x8xbf16> to vector<8x8xbf16>
    %137 = vector.shape_cast %134 : vector<8x8xbf16> to vector<1x1x8x8xbf16>
    tpu.vector_store %arg14[%c1_78, %c0_79, %c0_80, %c0_81], %137 {strides = array<i32>} : memref<2x4x8x8xbf16, #tpu.memory_space<vmem>>, vector<1x1x8x8xbf16>,
    %138 = arith.truncf %133 : vector<8x8xf32> to vector<8x8xbf16>
    %cst_82 = arith.constant dense<0.000000e+00> : vector<8x8xf32>
    %139 = tpu.matmul %138, %122, %cst_82 {dimension_numbers = #tpu.dot_dimension_numbers<[1], [0], [0], [1], [0, 0, 1, 1], [], []>} : vector<8x8xbf16>, vector<8x8xbf16>, vector<8x8xf32> -> vector<8x8xf32>
    %c1_i32_83 = arith.constant 1 : i32
    %140 = arith.addi %3, %c1_i32_83 : i32
    %c1_84 = arith.constant 1 : index
    %141 = arith.index_cast %140 : i32 to index
    %c0_85 = arith.constant 0 : index
    %c0_86 = arith.constant 0 : index
    %142 = vector.load %arg15[%c1_84, %141, %c0_85, %c0_86] : memref<2x4x8x8xbf16, #tpu.memory_space<vmem>>, vector<1x1x8x8xbf16>
    %143 = vector.shape_cast %142 : vector<1x1x8x8xbf16> to vector<8x8xbf16>
    %c1_87 = arith.constant 1 : index
    %144 = arith.index_cast %140 : i32 to index
    %c0_88 = arith.constant 0 : index
    %c0_89 = arith.constant 0 : index
    %145 = vector.load %arg16[%c1_87, %144, %c0_88, %c0_89] : memref<2x4x8x8xbf16, #tpu.memory_space<vmem>>, vector<1x1x8x8xbf16>
    %146 = vector.shape_cast %145 : vector<1x1x8x8xbf16> to vector<8x8xbf16>
    %c1_90 = arith.constant 1 : index
    %147 = arith.index_cast %140 : i32 to index
    %c0_91 = arith.constant 0 : index
    %c0_92 = arith.constant 0 : index
    %148 = vector.load %arg17[%c1_90, %147, %c0_91, %c0_92] : memref<2x4x8x8xbf16, #tpu.memory_space<vmem>>, vector<1x1x8x8xbf16>
    %149 = vector.shape_cast %148 : vector<1x1x8x8xbf16> to vector<8x8xbf16>
    %cst_93 = arith.constant dense<0.000000e+00> : vector<8x8xf32>
    %150 = tpu.matmul %143, %146, %cst_93 {dimension_numbers = #tpu.dot_dimension_numbers<[1], [1], [0], [0], [0, 0, 1, 0], [], []>} : vector<8x8xbf16>, vector<8x8xbf16>, vector<8x8xf32> -> vector<8x8xf32>
    %cst_94 = arith.constant dense<0xFF800000> : vector<8xf32>
    %151 = vector.multi_reduction <maximumf>, %150, %cst_94 [1] : vector<8x8xf32> to vector<8xf32>
    %152 = vector.shape_cast %151 : vector<8xf32> to vector<8x1xf32>
    %153 = vector.broadcast %152 : vector<8x1xf32> to vector<8x8xf32>
    %154 = arith.subf %150, %153 : vector<8x8xf32>
    %155 = math.exp %154 : vector<8x8xf32>
    %cst_95 = arith.constant dense<0.000000e+00> : vector<8xf32>
    %156 = vector.multi_reduction <add>, %155, %cst_95 [1] : vector<8x8xf32> to vector<8xf32>
    %157 = vector.shape_cast %156 : vector<8xf32> to vector<8x1xf32>
    %158 = tpu.reciprocal %157 {approx = true} : vector<8x1xf32> -> vector<8x1xf32>
    %159 = vector.broadcast %158 : vector<8x1xf32> to vector<8x8xf32>
    %160 = arith.mulf %155, %159 : vector<8x8xf32>
    %161 = arith.truncf %160 : vector<8x8xf32> to vector<8x8xbf16>
    %c1_96 = arith.constant 1 : index
    %c1_97 = arith.constant 1 : index
    %c0_98 = arith.constant 0 : index
    %c0_99 = arith.constant 0 : index
    %162 = vector.load %arg14[%c1_96, %c1_97, %c0_98, %c0_99] : memref<2x4x8x8xbf16, #tpu.memory_space<vmem>>, vector<1x1x8x8xbf16>
    %163 = vector.shape_cast %162 : vector<1x1x8x8xbf16> to vector<8x8xbf16>
    %164 = vector.shape_cast %161 : vector<8x8xbf16> to vector<1x1x8x8xbf16>
    tpu.vector_store %arg14[%c1_96, %c1_97, %c0_98, %c0_99], %164 {strides = array<i32>} : memref<2x4x8x8xbf16, #tpu.memory_space<vmem>>, vector<1x1x8x8xbf16>,
    %165 = arith.truncf %160 : vector<8x8xf32> to vector<8x8xbf16>
    %cst_100 = arith.constant dense<0.000000e+00> : vector<8x8xf32>
    %166 = tpu.matmul %165, %149, %cst_100 {dimension_numbers = #tpu.dot_dimension_numbers<[1], [0], [0], [1], [0, 0, 1, 1], [], []>} : vector<8x8xbf16>, vector<8x8xbf16>, vector<8x8xf32> -> vector<8x8xf32>
    %c2_i32_101 = arith.constant 2 : i32
    %167 = arith.addi %3, %c2_i32_101 : i32
    %c1_102 = arith.constant 1 : index
    %168 = arith.index_cast %167 : i32 to index
    %c0_103 = arith.constant 0 : index
    %c0_104 = arith.constant 0 : index
    %169 = vector.load %arg15[%c1_102, %168, %c0_103, %c0_104] : memref<2x4x8x8xbf16, #tpu.memory_space<vmem>>, vector<1x1x8x8xbf16>
    %170 = vector.shape_cast %169 : vector<1x1x8x8xbf16> to vector<8x8xbf16>
    %c1_105 = arith.constant 1 : index
    %171 = arith.index_cast %167 : i32 to index
    %c0_106 = arith.constant 0 : index
    %c0_107 = arith.constant 0 : index
    %172 = vector.load %arg16[%c1_105, %171, %c0_106, %c0_107] : memref<2x4x8x8xbf16, #tpu.memory_space<vmem>>, vector<1x1x8x8xbf16>
    %173 = vector.shape_cast %172 : vector<1x1x8x8xbf16> to vector<8x8xbf16>
    %c1_108 = arith.constant 1 : index
    %174 = arith.index_cast %167 : i32 to index
    %c0_109 = arith.constant 0 : index
    %c0_110 = arith.constant 0 : index
    %175 = vector.load %arg17[%c1_108, %174, %c0_109, %c0_110] : memref<2x4x8x8xbf16, #tpu.memory_space<vmem>>, vector<1x1x8x8xbf16>
    %176 = vector.shape_cast %175 : vector<1x1x8x8xbf16> to vector<8x8xbf16>
    %cst_111 = arith.constant dense<0.000000e+00> : vector<8x8xf32>
    %177 = tpu.matmul %170, %173, %cst_111 {dimension_numbers = #tpu.dot_dimension_numbers<[1], [1], [0], [0], [0, 0, 1, 0], [], []>} : vector<8x8xbf16>, vector<8x8xbf16>, vector<8x8xf32> -> vector<8x8xf32>
    %cst_112 = arith.constant dense<0xFF800000> : vector<8xf32>
    %178 = vector.multi_reduction <maximumf>, %177, %cst_112 [1] : vector<8x8xf32> to vector<8xf32>
    %179 = vector.shape_cast %178 : vector<8xf32> to vector<8x1xf32>
    %180 = vector.broadcast %179 : vector<8x1xf32> to vector<8x8xf32>
    %181 = arith.subf %177, %180 : vector<8x8xf32>
    %182 = math.exp %181 : vector<8x8xf32>
    %cst_113 = arith.constant dense<0.000000e+00> : vector<8xf32>
    %183 = vector.multi_reduction <add>, %182, %cst_113 [1] : vector<8x8xf32> to vector<8xf32>
    %184 = vector.shape_cast %183 : vector<8xf32> to vector<8x1xf32>
    %185 = tpu.reciprocal %184 {approx = true} : vector<8x1xf32> -> vector<8x1xf32>
    %186 = vector.broadcast %185 : vector<8x1xf32> to vector<8x8xf32>
    %187 = arith.mulf %182, %186 : vector<8x8xf32>
    %188 = arith.truncf %187 : vector<8x8xf32> to vector<8x8xbf16>
    %c1_114 = arith.constant 1 : index
    %c2_115 = arith.constant 2 : index
    %c0_116 = arith.constant 0 : index
    %c0_117 = arith.constant 0 : index
    %189 = vector.load %arg14[%c1_114, %c2_115, %c0_116, %c0_117] : memref<2x4x8x8xbf16, #tpu.memory_space<vmem>>, vector<1x1x8x8xbf16>
    %190 = vector.shape_cast %189 : vector<1x1x8x8xbf16> to vector<8x8xbf16>
    %191 = vector.shape_cast %188 : vector<8x8xbf16> to vector<1x1x8x8xbf16>
    tpu.vector_store %arg14[%c1_114, %c2_115, %c0_116, %c0_117], %191 {strides = array<i32>} : memref<2x4x8x8xbf16, #tpu.memory_space<vmem>>, vector<1x1x8x8xbf16>,
    %192 = arith.truncf %187 : vector<8x8xf32> to vector<8x8xbf16>
    %cst_118 = arith.constant dense<0.000000e+00> : vector<8x8xf32>
    %193 = tpu.matmul %192, %176, %cst_118 {dimension_numbers = #tpu.dot_dimension_numbers<[1], [0], [0], [1], [0, 0, 1, 1], [], []>} : vector<8x8xbf16>, vector<8x8xbf16>, vector<8x8xf32> -> vector<8x8xf32>
    %c3_i32_119 = arith.constant 3 : i32
    %194 = arith.addi %3, %c3_i32_119 : i32
    %c1_120 = arith.constant 1 : index
    %195 = arith.index_cast %194 : i32 to index
    %c0_121 = arith.constant 0 : index
    %c0_122 = arith.constant 0 : index
    %196 = vector.load %arg15[%c1_120, %195, %c0_121, %c0_122] : memref<2x4x8x8xbf16, #tpu.memory_space<vmem>>, vector<1x1x8x8xbf16>
    %197 = vector.shape_cast %196 : vector<1x1x8x8xbf16> to vector<8x8xbf16>
    %c1_123 = arith.constant 1 : index
    %198 = arith.index_cast %194 : i32 to index
    %c0_124 = arith.constant 0 : index
    %c0_125 = arith.constant 0 : index
    %199 = vector.load %arg16[%c1_123, %198, %c0_124, %c0_125] : memref<2x4x8x8xbf16, #tpu.memory_space<vmem>>, vector<1x1x8x8xbf16>
    %200 = vector.shape_cast %199 : vector<1x1x8x8xbf16> to vector<8x8xbf16>
    %c1_126 = arith.constant 1 : index
    %201 = arith.index_cast %194 : i32 to index
    %c0_127 = arith.constant 0 : index
    %c0_128 = arith.constant 0 : index
    %202 = vector.load %arg17[%c1_126, %201, %c0_127, %c0_128] : memref<2x4x8x8xbf16, #tpu.memory_space<vmem>>, vector<1x1x8x8xbf16>
    %203 = vector.shape_cast %202 : vector<1x1x8x8xbf16> to vector<8x8xbf16>
    %cst_129 = arith.constant dense<0.000000e+00> : vector<8x8xf32>
    %204 = tpu.matmul %197, %200, %cst_129 {dimension_numbers = #tpu.dot_dimension_numbers<[1], [1], [0], [0], [0, 0, 1, 0], [], []>} : vector<8x8xbf16>, vector<8x8xbf16>, vector<8x8xf32> -> vector<8x8xf32>
    %cst_130 = arith.constant dense<0xFF800000> : vector<8xf32>
    %205 = vector.multi_reduction <maximumf>, %204, %cst_130 [1] : vector<8x8xf32> to vector<8xf32>
    %206 = vector.shape_cast %205 : vector<8xf32> to vector<8x1xf32>
    %207 = vector.broadcast %206 : vector<8x1xf32> to vector<8x8xf32>
    %208 = arith.subf %204, %207 : vector<8x8xf32>
    %209 = math.exp %208 : vector<8x8xf32>
    %cst_131 = arith.constant dense<0.000000e+00> : vector<8xf32>
    %210 = vector.multi_reduction <add>, %209, %cst_131 [1] : vector<8x8xf32> to vector<8xf32>
    %211 = vector.shape_cast %210 : vector<8xf32> to vector<8x1xf32>
    %212 = tpu.reciprocal %211 {approx = true} : vector<8x1xf32> -> vector<8x1xf32>
    %213 = vector.broadcast %212 : vector<8x1xf32> to vector<8x8xf32>
    %214 = arith.mulf %209, %213 : vector<8x8xf32>
    %215 = arith.truncf %214 : vector<8x8xf32> to vector<8x8xbf16>
    %c1_132 = arith.constant 1 : index
    %c3_133 = arith.constant 3 : index
    %c0_134 = arith.constant 0 : index
    %c0_135 = arith.constant 0 : index
    %216 = vector.load %arg14[%c1_132, %c3_133, %c0_134, %c0_135] : memref<2x4x8x8xbf16, #tpu.memory_space<vmem>>, vector<1x1x8x8xbf16>
    %217 = vector.shape_cast %216 : vector<1x1x8x8xbf16> to vector<8x8xbf16>
    %218 = vector.shape_cast %215 : vector<8x8xbf16> to vector<1x1x8x8xbf16>
    tpu.vector_store %arg14[%c1_132, %c3_133, %c0_134, %c0_135], %218 {strides = array<i32>} : memref<2x4x8x8xbf16, #tpu.memory_space<vmem>>, vector<1x1x8x8xbf16>,
    %219 = arith.truncf %214 : vector<8x8xf32> to vector<8x8xbf16>
    %cst_136 = arith.constant dense<0.000000e+00> : vector<8x8xf32>
    %220 = tpu.matmul %219, %203, %cst_136 {dimension_numbers = #tpu.dot_dimension_numbers<[1], [0], [0], [1], [0, 0, 1, 1], [], []>} : vector<8x8xbf16>, vector<8x8xbf16>, vector<8x8xf32> -> vector<8x8xf32>
    %221 = tpu.concatenate %139, %166, %193, %220 in 1 : vector<8x8xf32>, vector<8x8xf32>, vector<8x8xf32>, vector<8x8xf32> -> vector<8x32xf32>
    %222 = tpu.concatenate %112, %221 in 0 : vector<8x32xf32>, vector<8x32xf32> -> vector<16x32xf32>
    %223 = arith.truncf %222 : vector<16x32xf32> to vector<16x32xbf16>
    %c0_137 = arith.constant 0 : index
    %c0_138 = arith.constant 0 : index
    %224 = vector.load %arg18[%c0_137, %c0_138] : memref<16x32xf32, #tpu.memory_space<vmem>>, vector<16x32xf32>
    %c0_139 = arith.constant 0 : index
    %c0_140 = arith.constant 0 : index
    %225 = vector.load %arg5[%c0_139, %c0_140] : memref<32x32xbf16, #tpu.memory_space<vmem>>, vector<32x32xbf16>
    %cst_141 = arith.constant dense<0.000000e+00> : vector<16x32xf32>
    %226 = tpu.matmul %223, %225, %cst_141 {dimension_numbers = #tpu.dot_dimension_numbers<[1], [0], [0], [1], [0, 0, 1, 1], [], []>} : vector<16x32xbf16>, vector<32x32xbf16>, vector<16x32xf32> -> vector<16x32xf32>
    %227 = arith.addf %224, %226 : vector<16x32xf32>
    %c0_142 = arith.constant 0 : index
    %c0_143 = arith.constant 0 : index
    %228 = vector.load %arg18[%c0_142, %c0_143] : memref<16x32xf32, #tpu.memory_space<vmem>>, vector<16x32xf32>
    tpu.vector_store %arg18[%c0_142, %c0_143], %227 {strides = array<i32>} : memref<16x32xf32, #tpu.memory_space<vmem>>, vector<16x32xf32>,
    %c0_i32_144 = arith.constant 0 : i32
    %229 = arith.cmpi eq, %arg1, %c0_i32_144 : i32
    %230 = arith.extui %229 : i1 to i32
    %c0_i32_145 = arith.constant 0 : i32
    %231 = arith.cmpi ne, %230, %c0_i32_145 : i32
    scf.if %231 {
      %c0_146 = arith.constant 0 : index
      %c0_147 = arith.constant 0 : index
      %c0_148 = arith.constant 0 : index
      %232 = vector.load %arg2[%c0_146, %c0_147, %c0_148] : memref<2x8x32xf32, #tpu.memory_space<vmem>>, vector<2x8x32xf32>
      %233 = vector.shape_cast %232 : vector<2x8x32xf32> to vector<16x32xf32>
      %c0_149 = arith.constant 0 : index
      %c0_150 = arith.constant 0 : index
      %234 = vector.load %arg18[%c0_149, %c0_150] : memref<16x32xf32, #tpu.memory_space<vmem>>, vector<16x32xf32>
      %235 = arith.addf %233, %234 : vector<16x32xf32>
      %c0_151 = arith.constant 0 : index
      %c0_152 = arith.constant 0 : index
      %236 = vector.load %arg6[%c0_151, %c0_152] : memref<1x32xf32, #tpu.memory_space<vmem>>, vector<1x32xf32>
      %237 = vector.shape_cast %236 : vector<1x32xf32> to vector<32xf32>
      %238 = vector.shape_cast %237 : vector<32xf32> to vector<1x32xf32>
      %239 = vector.broadcast %238 : vector<1x32xf32> to vector<16x32xf32>
      %240 = arith.addf %235, %239 : vector<16x32xf32>
      %241 = arith.truncf %240 : vector<16x32xf32> to vector<16x32xbf16>
      %c0_153 = arith.constant 0 : index
      %c0_154 = arith.constant 0 : index
      %242 = vector.load %arg7[%c0_153, %c0_154] : memref<32x64xbf16, #tpu.memory_space<vmem>>, vector<32x64xbf16>
      %cst_155 = arith.constant dense<0.000000e+00> : vector<16x64xf32>
      %243 = tpu.matmul %241, %242, %cst_155 {dimension_numbers = #tpu.dot_dimension_numbers<[1], [0], [0], [1], [0, 0, 1, 1], [], []>} : vector<16x32xbf16>, vector<32x64xbf16>, vector<16x64xf32> -> vector<16x64xf32>
      %c0_156 = arith.constant 0 : index
      %c0_157 = arith.constant 0 : index
      %244 = vector.load %arg8[%c0_156, %c0_157] : memref<1x64xf32, #tpu.memory_space<vmem>>, vector<1x64xf32>
      %245 = vector.shape_cast %244 : vector<1x64xf32> to vector<64xf32>
      %246 = vector.shape_cast %245 : vector<64xf32> to vector<1x64xf32>
      %247 = vector.broadcast %246 : vector<1x64xf32> to vector<16x64xf32>
      %248 = arith.addf %243, %247 : vector<16x64xf32>
      %cst_158 = arith.constant 5.000000e-01 : f32
      %249 = vector.broadcast %cst_158 : f32 to vector<16x64xf32>
      %250 = arith.mulf %249, %248 : vector<16x64xf32>
      %cst_159 = arith.constant 4.471500e-02 : f32
      %251 = vector.broadcast %cst_159 : f32 to vector<16x64xf32>
      %252 = arith.mulf %251, %248 : vector<16x64xf32>
      %253 = arith.mulf %252, %248 : vector<16x64xf32>
      %254 = arith.mulf %253, %248 : vector<16x64xf32>
      %255 = arith.addf %248, %254 : vector<16x64xf32>
      %cst_160 = arith.constant 0.797884583 : f32
      %256 = vector.broadcast %cst_160 : f32 to vector<16x64xf32>
      %257 = arith.mulf %256, %255 : vector<16x64xf32>
      %258 = math.tanh %257 : vector<16x64xf32>
      %cst_161 = arith.constant 1.000000e+00 : f32
      %259 = vector.broadcast %cst_161 : f32 to vector<16x64xf32>
      %260 = arith.addf %259, %258 : vector<16x64xf32>
      %261 = arith.mulf %250, %260 : vector<16x64xf32>
      %262 = arith.truncf %261 : vector<16x64xf32> to vector<16x64xbf16>
      %c0_162 = arith.constant 0 : index
      %c0_163 = arith.constant 0 : index
      %263 = vector.load %arg9[%c0_162, %c0_163] : memref<64x32xbf16, #tpu.memory_space<vmem>>, vector<64x32xbf16>
      %cst_164 = arith.constant dense<0.000000e+00> : vector<16x32xf32>
      %264 = tpu.matmul %262, %263, %cst_164 {dimension_numbers = #tpu.dot_dimension_numbers<[1], [0], [0], [1], [0, 0, 1, 1], [], []>} : vector<16x64xbf16>, vector<64x32xbf16>, vector<16x32xf32> -> vector<16x32xf32>
      %c0_165 = arith.constant 0 : index
      %c0_166 = arith.constant 0 : index
      %265 = vector.load %arg10[%c0_165, %c0_166] : memref<1x32xf32, #tpu.memory_space<vmem>>, vector<1x32xf32>
      %266 = vector.shape_cast %265 : vector<1x32xf32> to vector<32xf32>
      %267 = vector.shape_cast %266 : vector<32xf32> to vector<1x32xf32>
      %268 = vector.broadcast %267 : vector<1x32xf32> to vector<16x32xf32>
      %269 = arith.addf %264, %268 : vector<16x32xf32>
      %270 = arith.addf %240, %269 : vector<16x32xf32>
      %cst_167 = arith.constant dense<0.000000e+00> : vector<16xf32>
      %271 = vector.multi_reduction <add>, %270, %cst_167 [1] : vector<16x32xf32> to vector<16xf32>
      %272 = vector.shape_cast %271 : vector<16xf32> to vector<16x1xf32>
      %cst_168 = arith.constant 3.200000e+01 : f32
      %273 = vector.broadcast %cst_168 : f32 to vector<16x1xf32>
      %274 = arith.divf %272, %273 : vector<16x1xf32>
      %275 = vector.broadcast %274 : vector<16x1xf32> to vector<16x32xf32>
      %276 = arith.subf %270, %275 : vector<16x32xf32>
      %277 = arith.mulf %276, %276 : vector<16x32xf32>
      %cst_169 = arith.constant dense<0.000000e+00> : vector<16xf32>
      %278 = vector.multi_reduction <add>, %277, %cst_169 [1] : vector<16x32xf32> to vector<16xf32>
      %279 = vector.shape_cast %278 : vector<16xf32> to vector<16x1xf32>
      %cst_170 = arith.constant 3.200000e+01 : f32
      %280 = vector.broadcast %cst_170 : f32 to vector<16x1xf32>
      %281 = arith.divf %279, %280 : vector<16x1xf32>
      %cst_171 = arith.constant 9.99999974E-6 : f32
      %282 = vector.broadcast %cst_171 : f32 to vector<16x1xf32>
      %283 = arith.addf %281, %282 : vector<16x1xf32>
      %284 = math.rsqrt %283 : vector<16x1xf32>
      %285 = vector.broadcast %284 : vector<16x1xf32> to vector<16x32xf32>
      %286 = arith.mulf %276, %285 : vector<16x32xf32>
      %c0_172 = arith.constant 0 : index
      %c0_173 = arith.constant 0 : index
      %287 = vector.load %arg11[%c0_172, %c0_173] : memref<1x32xf32, #tpu.memory_space<vmem>>, vector<1x32xf32>
      %288 = vector.shape_cast %287 : vector<1x32xf32> to vector<32xf32>
      %289 = vector.shape_cast %288 : vector<32xf32> to vector<1x32xf32>
      %290 = vector.broadcast %289 : vector<1x32xf32> to vector<16x32xf32>
      %291 = arith.mulf %286, %290 : vector<16x32xf32>
      %c0_174 = arith.constant 0 : index
      %c0_175 = arith.constant 0 : index
      %292 = vector.load %arg12[%c0_174, %c0_175] : memref<1x32xf32, #tpu.memory_space<vmem>>, vector<1x32xf32>
      %293 = vector.shape_cast %292 : vector<1x32xf32> to vector<32xf32>
      %294 = vector.shape_cast %293 : vector<32xf32> to vector<1x32xf32>
      %295 = vector.broadcast %294 : vector<1x32xf32> to vector<16x32xf32>
      %296 = arith.addf %291, %295 : vector<16x32xf32>
      %297 = vector.shape_cast %296 : vector<16x32xf32> to vector<2x8x32xf32>
      %c0_176 = arith.constant 0 : index
      %c0_177 = arith.constant 0 : index
      %c0_178 = arith.constant 0 : index
      %298 = vector.load %arg13[%c0_176, %c0_177, %c0_178] : memref<2x8x32xf32, #tpu.memory_space<vmem>>, vector<2x8x32xf32>
      tpu.vector_store %arg13[%c0_176, %c0_177, %c0_178], %297 {strides = array<i32>} : memref<2x8x32xf32, #tpu.memory_space<vmem>>, vector<2x8x32xf32>,
    } else {
    }
    return
  }
  func.func @transform_0(%arg0: i32, %arg1: i32) -> (i32, i32, i32) {
    %c0_i32 = arith.constant 0 : i32
    %c0_i32_0 = arith.constant 0 : i32
    %c0_i32_1 = arith.constant 0 : i32
    return %arg0, %c0_i32, %c0_i32_0 : i32, i32, i32
  }
  func.func @transform_1(%arg0: i32, %arg1: i32) -> (i32, i32) {
    %c0_i32 = arith.constant 0 : i32
    %c0_i32_0 = arith.constant 0 : i32
    %c0_i32_1 = arith.constant 0 : i32
    return %c0_i32, %c0_i32_0 : i32, i32
  }
  func.func @transform_2(%arg0: i32, %arg1: i32) -> (i32, i32) {
    %c0_i32 = arith.constant 0 : i32
    %c0_i32_0 = arith.constant 0 : i32
    %c0_i32_1 = arith.constant 0 : i32
    return %c0_i32, %c0_i32_0 : i32, i32
  }
  func.func @transform_3(%arg0: i32, %arg1: i32) -> (i32, i32) {
    %c0_i32 = arith.constant 0 : i32
    %c0_i32_0 = arith.constant 0 : i32
    return %arg1, %c0_i32 : i32, i32
  }
  func.func @transform_4(%arg0: i32, %arg1: i32) -> (i32, i32) {
    %c0_i32 = arith.constant 0 : i32
    %c0_i32_0 = arith.constant 0 : i32
    %c0_i32_1 = arith.constant 0 : i32
    return %c0_i32, %c0_i32_0 : i32, i32
  }
  func.func @transform_5(%arg0: i32, %arg1: i32) -> (i32, i32) {
    %c0_i32 = arith.constant 0 : i32
    %c0_i32_0 = arith.constant 0 : i32
    %c0_i32_1 = arith.constant 0 : i32
    return %c0_i32, %c0_i32_0 : i32, i32
  }
  func.func @transform_6(%arg0: i32, %arg1: i32) -> (i32, i32) {
    %c0_i32 = arith.constant 0 : i32
    %c0_i32_0 = arith.constant 0 : i32
    %c0_i32_1 = arith.constant 0 : i32
    return %c0_i32, %c0_i32_0 : i32, i32
  }
  func.func @transform_7(%arg0: i32, %arg1: i32) -> (i32, i32) {
    %c0_i32 = arith.constant 0 : i32
    %c0_i32_0 = arith.constant 0 : i32
    %c0_i32_1 = arith.constant 0 : i32
    return %c0_i32, %c0_i32_0 : i32, i32
  }
  func.func @transform_8(%arg0: i32, %arg1: i32) -> (i32, i32) {
    %c0_i32 = arith.constant 0 : i32
    %c0_i32_0 = arith.constant 0 : i32
    %c0_i32_1 = arith.constant 0 : i32
    return %c0_i32, %c0_i32_0 : i32, i32
  }
  func.func @transform_9(%arg0: i32, %arg1: i32) -> (i32, i32) {
    %c0_i32 = arith.constant 0 : i32
    %c0_i32_0 = arith.constant 0 : i32
    %c0_i32_1 = arith.constant 0 : i32
    return %c0_i32, %c0_i32_0 : i32, i32
  }
  func.func @transform_10(%arg0: i32, %arg1: i32) -> (i32, i32) {
    %c0_i32 = arith.constant 0 : i32
    %c0_i32_0 = arith.constant 0 : i32
    %c0_i32_1 = arith.constant 0 : i32
    return %c0_i32, %c0_i32_0 : i32, i32
  }
  func.func @transform_11(%arg0: i32, %arg1: i32) -> (i32, i32, i32) {
    %c0_i32 = arith.constant 0 : i32
    %c0_i32_0 = arith.constant 0 : i32
    %c0_i32_1 = arith.constant 0 : i32
    return %arg0, %c0_i32, %c0_i32_0 : i32, i32, i32
  }
  func.func @transform_12(%arg0: i32, %arg1: i32) -> (i32, i32, i32, i32) {
    %c0_i32 = arith.constant 0 : i32
    %c0_i32_0 = arith.constant 0 : i32
    %c0_i32_1 = arith.constant 0 : i32
    return %arg0, %arg1, %c0_i32, %c0_i32_0 : i32, i32, i32, i32
  }
}

</mosaic_0001>

<llo_original>
// kernel: tpu_custom_call.1
$region0: #{tpu_custom_call.1}
  #allocation0 [shape = 'u32[]', space=smem, size = 0x4, offset = 0x4, fixed_abs, tag = 'smem constant byte address 0x4 - core index']
  #allocation1 [shape = 'u32[144,128]{1,0:T(1,128)}', space=vmem, size = 0x12000, scoped, tag = 'internal scratch']
  #allocation2 [shape = 'bf16[2,4,8,8]{3,2,1,0:T(8,128)(2,1)}', space=vmem, size = 0x4000, scoped, tag = 'scratch operand']
  #allocation3 [shape = 'bf16[2,4,8,8]{3,2,1,0:T(8,128)(2,1)}', space=vmem, size = 0x4000, scoped, tag = 'scratch operand']
  #allocation4 [shape = 'bf16[2,4,8,8]{3,2,1,0:T(8,128)(2,1)}', space=vmem, size = 0x4000, scoped, tag = 'scratch operand']
  #allocation5 [shape = 'f32[16,32]{1,0:T(8,128)}', space=vmem, size = 0x2000, scoped, tag = 'scratch operand']
  %s0 = inlined_call_operand.vmem [shape: f32[2,8,32], index: 0, kind: input, shape index: {}]
  %s1 = inlined_call_operand.vmem [shape: bf16[32,96], index: 1, kind: input, shape index: {}]
  %s2 = inlined_call_operand.vmem [shape: f32[1,96], index: 2, kind: input, shape index: {}]
  %s3 = inlined_call_operand.vmem [shape: bf16[32,32], index: 3, kind: input, shape index: {}]
  %s4 = inlined_call_operand.vmem [shape: f32[1,32], index: 4, kind: input, shape index: {}]
  %s5 = inlined_call_operand.hbm [shape: bf16[32,64], index: 5, kind: input, shape index: {}]
  %s6 = inlined_call_operand.vmem [shape: f32[1,64], index: 6, kind: input, shape index: {}]
  %s7 = inlined_call_operand.vmem [shape: bf16[64,32], index: 7, kind: input, shape index: {}]
  %s8 = inlined_call_operand.vmem [shape: f32[1,32], index: 8, kind: input, shape index: {}]
  %s9 = inlined_call_operand.vmem [shape: f32[1,32], index: 9, kind: input, shape index: {}]
  %s10 = inlined_call_operand.vmem [shape: f32[1,32], index: 10, kind: input, shape index: {}]
  %s11 = inlined_call_operand.hbm [shape: f32[2,8,32], index: 11, kind: output, shape index: {0}]
  %s12 = inlined_call_operand.hbm [shape: bf16[2,4,8,8], index: 12, kind: output, shape index: {1}]
  %13 = xla_tuple %s11, %s12
  %s14 = sld [smem:[#allocation0]]
  $region74: #{tpu_custom_call.1} parent=0
    _
  %s16 = ssub.s32 1, %s14
  %s17 = scalar_select 0, %s16, %s14
  $region1: #{tpu_custom_call.1} parent=0
    #allocation6 [shape = 'u8[8192]{0}', space=vmem, size = 0x2000, scoped, tag = 'input window, operand 5, single buffered']
    #allocation7 [shape = 's32[1]{0}', space=sflag, size = 0x4, scoped, tag = 'scoped memory for tpu_custom_call.1']
    #allocation8 [shape = 's32[1]{0}', space=sflag, size = 0x4, scoped, tag = 'scoped memory for tpu_custom_call.1']
    #allocation9 [shape = 'u8[8192]{0}', space=vmem, size = 0x2000, scoped, tag = 'output window, operand 0, single buffered']
    #allocation10 [shape = 'u8[16384]{0}', space=vmem, size = 0x4000, scoped, tag = 'output window, operand 1, single buffered']
    #allocation11 [shape = 's32[1]{0}', space=sflag, size = 0x4, scoped, tag = 'scoped memory for tpu_custom_call.1']
    %18 = vsyncpa [#allocation7], 0
    %19 = vsyncpa [#allocation8], 0
    %20 = vsyncpa [#allocation11], 0
    // Predicated region
    $region2: #{tpu_custom_call.1} parent=1 // pred_check
      _
    $region3: #{tpu_custom_call.1} parent=1 // pred_check_branch
      %22 = sbr.rel (0) target = $region5
    $region4: #{tpu_custom_call.1} parent=1 // pred_region
      _
    $region5: #{tpu_custom_call.1} parent=1 // pred_fallthru
      _
    // Predicated region
    $region6: #{tpu_custom_call.1} parent=1 // pred_check
      _
    $region7: #{tpu_custom_call.1} parent=1 // pred_check_branch
      %24 = sbr.rel (0) target = $region9
    $region8: #{tpu_custom_call.1} parent=1 // pred_region
      _
    $region9: #{tpu_custom_call.1} parent=1 // pred_fallthru
      _
    // Predicated region
    $region10: #{tpu_custom_call.1} parent=1 // pred_check
      _
    $region11: #{tpu_custom_call.1} parent=1 // pred_check_branch
      %26 = sbr.rel (0) target = $region13
    $region12: #{tpu_custom_call.1} parent=1 // pred_region
      _
    $region13: #{tpu_custom_call.1} parent=1 // pred_fallthru
      _
    // Predicated region
    $region14: #{tpu_custom_call.1} parent=1 // pred_check
      _
    $region15: #{tpu_custom_call.1} parent=1 // pred_check_branch
      %28 = sbr.rel (0) target = $region17
    $region16: #{tpu_custom_call.1} parent=1 // pred_region
      _
    $region17: #{tpu_custom_call.1} parent=1 // pred_fallthru
      _
    // Predicated region
    $region18: #{tpu_custom_call.1} parent=1 // pred_check
      _
    $region19: #{tpu_custom_call.1} parent=1 // pred_check_branch
      %30 = sbr.rel (0) target = $region21
    $region20: #{tpu_custom_call.1} parent=1 // pred_region
      _
    $region21: #{tpu_custom_call.1} parent=1 // pred_fallthru
      _
    // Predicated region
    $region22: #{tpu_custom_call.1} parent=1 // pred_check
      _
    $region23: #{tpu_custom_call.1} parent=1 // pred_check_branch
      %32 = sbr.rel (0) target = $region25
    $region24: #{tpu_custom_call.1} parent=1 // pred_region
      %s34 = ssub.s32 256, 256
      %35 = vsyncadd [#allocation7], %s34
      %s36 = sshll.u32 [#allocation6], 4
      %s37 = int_to_ptr.vmem [resolvable:$true] %s36
      %42 = dma.hbm_to_vmem [thread:$0]  %s5, 256, %s37, [#allocation7], 64, 64, 4
    $region25: #{tpu_custom_call.1} parent=1 // pred_fallthru
      _
    // Predicated region
    $region26: #{tpu_custom_call.1} parent=1 // pred_check
      _
    $region27: #{tpu_custom_call.1} parent=1 // pred_check_branch
      %44 = sbr.rel (0) target = $region29
    $region28: #{tpu_custom_call.1} parent=1 // pred_region
      _
    $region29: #{tpu_custom_call.1} parent=1 // pred_fallthru
      _
    // Predicated region
    $region30: #{tpu_custom_call.1} parent=1 // pred_check
      _
    $region31: #{tpu_custom_call.1} parent=1 // pred_check_branch
      %46 = sbr.rel (0) target = $region33
    $region32: #{tpu_custom_call.1} parent=1 // pred_region
      _
    $region33: #{tpu_custom_call.1} parent=1 // pred_fallthru
      _
    // Predicated region
    $region34: #{tpu_custom_call.1} parent=1 // pred_check
      _
    $region35: #{tpu_custom_call.1} parent=1 // pred_check_branch
      %48 = sbr.rel (0) target = $region37
    $region36: #{tpu_custom_call.1} parent=1 // pred_region
      _
    $region37: #{tpu_custom_call.1} parent=1 // pred_fallthru
      _
    // Predicated region
    $region38: #{tpu_custom_call.1} parent=1 // pred_check
      _
    $region39: #{tpu_custom_call.1} parent=1 // pred_check_branch
      %50 = sbr.rel (0) target = $region41
    $region40: #{tpu_custom_call.1} parent=1 // pred_region
      _
    $region41: #{tpu_custom_call.1} parent=1 // pred_fallthru
      _
    // Predicated region
    $region42: #{tpu_custom_call.1} parent=1 // pred_check
      _
    $region43: #{tpu_custom_call.1} parent=1 // pred_check_branch
      %52 = sbr.rel (0) target = $region45
    $region44: #{tpu_custom_call.1} parent=1 // pred_region
      _
    $region45: #{tpu_custom_call.1} parent=1 // pred_fallthru
      _
    // Predicated region
    $region46: #{tpu_custom_call.1} parent=1 // pred_check
      _
    $region47: #{tpu_custom_call.1} parent=1 // pred_check_branch
      %54 = sbr.rel (0) target = $region49
    $region48: #{tpu_custom_call.1} parent=1 // pred_region
      %55 = dma.done [#allocation7], 256
    $region49: #{tpu_custom_call.1} parent=1 // pred_fallthru
      _
    %p57 = scmp.eq.s32.totalorder 0, 0
    // Predicated region
    $region50: #{tpu_custom_call.1} parent=1 // pred_check
      %p58 = pneg %p57
    $region51: #{tpu_custom_call.1} parent=1 // pred_check_branch
      %60 = sbr.rel (%p58) target = $region53
    $region52: #{tpu_custom_call.1} parent=1 // pred_region
      %v61 = vld [vmem:[%s0] sm:$0xff]
      %v62 = vld [vmem:[%s0 + $0x8] sm:$0xff]
      %v63 = vpack.c.bf16 %v62, %v61
      %v64 = vld [vmem:[%s1] sm:$0xf]
      %v65 = vld [vmem:[%s1 + $0x4] sm:$0xf]
      %v66 = vld [vmem:[%s1 + $0x8] sm:$0xf]
      %v67 = vld [vmem:[%s1 + $0xc] sm:$0xf]
      %v68 = vld [vmem:[%s2] sm:$0x1]
      %v70 = vlaneseq
      %v71 = vshrl.u32 %v70, 7
      %v72 = vsub.s32 0, %v71
      %v73 = vrot.slane %v68, %v72
      %v79 = vunpack.c.l.b16 %v64
      %v80 = vunpack.c.l.b16 %v65
      %v81 = vunpack.c.l.b16 %v66
      %v82 = vunpack.c.l.b16 %v67
      %v83 = vpack.c.b16 %v80, %v79
      %v84 = vpack.c.b16 %v82, %v81
      %vm87 = vcmask 261120
      %v89 = vsel %vm87, %v63, 0
      %91 = vmatprep.subr.bf16.mxu0 0
      %92 = vmatpush1.bf16.msra.mxu0 %v83
      %93 = vmatprep.subr.bf16.mxu0 0
      %94 = vmatpush1.bf16.msra.mxu0 %v84
      %95 = vmatprep.subr.bf16.mxu0 0
      %96 = vmatpush1.bf16.msra.mxu0 0
      %97 = vmatprep.subr.bf16.mxu0 0
      %98 = vmatpush1.bf16.msra.mxu0 0
      %99 = vmatprep.subr.bf16.mxu0 0
      %100 = vmatpush1.bf16.msra.mxu0 0
      %101 = vmatprep.subr.bf16.mxu0 0
      %102 = vmatpush1.bf16.msra.mxu0 0
      %103 = vmatprep.subr.bf16.mxu0 0
      %104 = vmatpush1.bf16.msra.mxu0 0
      %105 = vmatprep.subr.bf16.mxu0 0
      %106 = vmatpush1.bf16.msra.mxu0 0
      %107 = vmatprep.subr.bf16.mxu0 0
      %108 = vmatpush1.bf16.msra.mxu0 0
      %109 = vmatprep.subr.bf16.mxu0 0
      %110 = vmatpush1.bf16.msra.mxu0 0
      %111 = vmatprep.subr.bf16.mxu0 0
      %112 = vmatpush1.bf16.msra.mxu0 0
      %113 = vmatprep.subr.bf16.mxu0 0
      %114 = vmatpush1.bf16.msra.mxu0 0
      %115 = vmatprep.subr.bf16.mxu0 0
      %116 = vmatpush1.bf16.msra.mxu0 0
      %117 = vmatprep.subr.bf16.mxu0 0
      %118 = vmatpush1.bf16.msra.mxu0 0
      %119 = vmatprep.subr.bf16.mxu0 0
      %120 = vmatpush1.bf16.msra.mxu0 0
      %121 = vmatprep.subr.bf16.mxu0 0
      %122 = vmatpush1.bf16.msra.mxu0 0
      %123 = vmatprep.mubr.bf16.mxu0 0
      %124 = vmatmul.mubr.bf16.gmra.mrb[0].mxu0 %v89
      %v125 = vpop.f32.mrb[0].mxu0
      %v126 = vadd.f32 %v73, %v125
      %v127 = vpop.f32.mrb[0].mxu0
      %v128 = vpop.f32.mrb[0].mxu0
      %v129 = vadd.f32 %v73, %v128
      %v130 = vpop.f32.mrb[0].mxu0
      %131 = vdwg.mxu0
      %v132 = vmul.f32 %v126, 0.35355338
      %v133 = vpack.c.bf16 %v132, %v132
      %vm134 = vcmask 60416
      %135 = vst.msk [vmem:[#allocation2] sm:$0xf] %vm134, %v133
      %v136 = vpack.c.bf16 %v126, %v126
      %v138 = vunpack.c.l.b16 %v136
      %v139 = vpack.c.b16 %v138, %v138
      %140 = vrot.lane.b32.xlu0 %v139, 96
      %v141 = vpop.permute.xlu0 %140
      %143 = vst.msk [vmem:[#allocation3] sm:$0xf] %vm134, %v141
      %144 = vrot.lane.b32.xlu0 %v139, 64
      %v145 = vpop.permute.xlu0 %144
      %147 = vst.msk [vmem:[#allocation4] sm:$0xf] %vm134, %v145
      %v149 = vunpack.c.l.b16 %v133
      %v150 = vpack.c.b16 %v149, %v149
      %151 = vrot.lane.b32.xlu0 %v150, 120
      %v152 = vpop.permute.xlu0 %151
      %s154 = scalar_lea.vmem [#allocation2], 4
      %155 = vst.msk [vmem:[%s154] sm:$0xf] %vm134, %v152
      %156 = vrot.lane.b32.xlu0 %v139, 88
      %v157 = vpop.permute.xlu0 %156
      %s159 = scalar_lea.vmem [#allocation3], 4
      %160 = vst.msk [vmem:[%s159] sm:$0xf] %vm134, %v157
      %161 = vrot.lane.b32.xlu0 %v139, 56
      %v162 = vpop.permute.xlu0 %161
      %s164 = scalar_lea.vmem [#allocation4], 4
      %165 = vst.msk [vmem:[%s164] sm:$0xf] %vm134, %v162
      %166 = vrot.lane.b32.xlu0 %v150, 112
      %v167 = vpop.permute.xlu0 %166
      %s169 = scalar_lea.vmem [#allocation2], 8
      %170 = vst.msk [vmem:[%s169] sm:$0xf] %vm134, %v167
      %171 = vrot.lane.b32.xlu0 %v139, 80
      %v172 = vpop.permute.xlu0 %171
      %s174 = scalar_lea.vmem [#allocation3], 8
      %175 = vst.msk [vmem:[%s174] sm:$0xf] %vm134, %v172
      %176 = vrot.lane.b32.xlu0 %v139, 48
      %v177 = vpop.permute.xlu0 %176
      %s179 = scalar_lea.vmem [#allocation4], 8
      %180 = vst.msk [vmem:[%s179] sm:$0xf] %vm134, %v177
      %181 = vrot.lane.b32.xlu0 %v150, 104
      %v182 = vpop.permute.xlu0 %181
      %s184 = scalar_lea.vmem [#allocation2], 12
      %185 = vst.msk [vmem:[%s184] sm:$0xf] %vm134, %v182
      %186 = vrot.lane.b32.xlu0 %v139, 72
      %v187 = vpop.permute.xlu0 %186
      %s189 = scalar_lea.vmem [#allocation3], 12
      %190 = vst.msk [vmem:[%s189] sm:$0xf] %vm134, %v187
      %191 = vrot.lane.b32.xlu0 %v139, 40
      %v192 = vpop.permute.xlu0 %191
      %s194 = scalar_lea.vmem [#allocation4], 12
      %195 = vst.msk [vmem:[%s194] sm:$0xf] %vm134, %v192
      %v196 = vmul.f32 %v129, 0.35355338
      %v197 = vpack.c.bf16 %v196, %v196
      %s198 = scalar_lea.vmem [#allocation2], 16
      %199 = vst.msk [vmem:[%s198] sm:$0xf] %vm134, %v197
      %v200 = vpack.c.bf16 %v129, %v129
      %v202 = vunpack.c.l.b16 %v200
      %v203 = vpack.c.b16 %v202, %v202
      %204 = vrot.lane.b32.xlu0 %v203, 96
      %v205 = vpop.permute.xlu0 %204
      %s207 = scalar_lea.vmem [#allocation3], 16
      %208 = vst.msk [vmem:[%s207] sm:$0xf] %vm134, %v205
      %209 = vrot.lane.b32.xlu0 %v203, 64
      %v210 = vpop.permute.xlu0 %209
      %s212 = scalar_lea.vmem [#allocation4], 16
      %213 = vst.msk [vmem:[%s212] sm:$0xf] %vm134, %v210
      %v215 = vunpack.c.l.b16 %v197
      %v216 = vpack.c.b16 %v215, %v215
      %217 = vrot.lane.b32.xlu0 %v216, 120
      %v218 = vpop.permute.xlu0 %217
      %s220 = scalar_lea.vmem [#allocation2], 20
      %221 = vst.msk [vmem:[%s220] sm:$0xf] %vm134, %v218
      %222 = vrot.lane.b32.xlu0 %v203, 88
      %v223 = vpop.permute.xlu0 %222
      %s225 = scalar_lea.vmem [#allocation3], 20
      %226 = vst.msk [vmem:[%s225] sm:$0xf] %vm134, %v223
      %227 = vrot.lane.b32.xlu0 %v203, 56
      %v228 = vpop.permute.xlu0 %227
      %s230 = scalar_lea.vmem [#allocation4], 20
      %231 = vst.msk [vmem:[%s230] sm:$0xf] %vm134, %v228
      %232 = vrot.lane.b32.xlu0 %v216, 112
      %v233 = vpop.permute.xlu0 %232
      %s235 = scalar_lea.vmem [#allocation2], 24
      %236 = vst.msk [vmem:[%s235] sm:$0xf] %vm134, %v233
      %237 = vrot.lane.b32.xlu0 %v203, 80
      %v238 = vpop.permute.xlu0 %237
      %s240 = scalar_lea.vmem [#allocation3], 24
      %241 = vst.msk [vmem:[%s240] sm:$0xf] %vm134, %v238
      %242 = vrot.lane.b32.xlu0 %v203, 48
      %v243 = vpop.permute.xlu0 %242
      %s245 = scalar_lea.vmem [#allocation4], 24
      %246 = vst.msk [vmem:[%s245] sm:$0xf] %vm134, %v243
      %247 = vrot.lane.b32.xlu0 %v216, 104
      %v248 = vpop.permute.xlu0 %247
      %s250 = scalar_lea.vmem [#allocation2], 28
      %251 = vst.msk [vmem:[%s250] sm:$0xf] %vm134, %v248
      %252 = vrot.lane.b32.xlu0 %v203, 72
      %v253 = vpop.permute.xlu0 %252
      %s255 = scalar_lea.vmem [#allocation3], 28
      %256 = vst.msk [vmem:[%s255] sm:$0xf] %vm134, %v253
      %257 = vrot.lane.b32.xlu0 %v203, 40
      %v258 = vpop.permute.xlu0 %257
      %s260 = scalar_lea.vmem [#allocation4], 28
      %261 = vst.msk [vmem:[%s260] sm:$0xf] %vm134, %v258
      %262 = vst.msk [vmem:[#allocation5] sm:$0xff] %vm87, 0.0
      %263 = vst.msk [vmem:[#allocation5 + $0x8] sm:$0xff] %vm87, 0.0
    $region53: #{tpu_custom_call.1} parent=1 // pred_fallthru
      _
    %s264 = smul.u32 0, 4
    %s265 = smul.addr %s264, 4
    %s266 = scalar_lea.vmem [#allocation2], %s265
    %v267 = vld [vmem:[%s266] sm:$0xf]
    %s268 = smul.addr %s264, 4
    %s269 = scalar_lea.vmem [#allocation3], %s268
    %v270 = vld [vmem:[%s269] sm:$0xf]
    %s271 = smul.addr %s264, 4
    %s272 = scalar_lea.vmem [#allocation4], %s271
    %v273 = vld [vmem:[%s272] sm:$0xf]
    %vm274 = vcmask 64512
    %v276 = vsel %vm274, %v267, 0
    %v279 = vsel %vm274, %v270, 0
    %281 = vmatprep.subr.bf16.mxu0 0
    %282 = vmatpush1.bf16.xpose.msra.mxu0 %v279
    %283 = vmatprep.subr.bf16.mxu0 0
    %284 = vmatpush1.bf16.xpose.msra.mxu0 0
    %285 = vmatprep.subr.bf16.mxu0 0
    %286 = vmatpush1.bf16.xpose.msra.mxu0 0
    %287 = vmatprep.subr.bf16.mxu0 0
    %288 = vmatpush1.bf16.xpose.msra.mxu0 0
    %289 = vmatprep.subr.bf16.mxu0 0
    %290 = vmatpush1.bf16.xpose.msra.mxu0 0
    %291 = vmatprep.subr.bf16.mxu0 0
    %292 = vmatpush1.bf16.xpose.msra.mxu0 0
    %293 = vmatprep.subr.bf16.mxu0 0
    %294 = vmatpush1.bf16.xpose.msra.mxu0 0
    %295 = vmatprep.subr.bf16.mxu0 0
    %296 = vmatpush1.bf16.xpose.msra.mxu0 0
    %297 = vmatprep.subr.bf16.mxu0 0
    %298 = vmatpush1.bf16.xpose.msra.mxu0 0
    %299 = vmatprep.subr.bf16.mxu0 0
    %300 = vmatpush1.bf16.xpose.msra.mxu0 0
    %301 = vmatprep.subr.bf16.mxu0 0
    %302 = vmatpush1.bf16.xpose.msra.mxu0 0
    %303 = vmatprep.subr.bf16.mxu0 0
    %304 = vmatpush1.bf16.xpose.msra.mxu0 0
    %305 = vmatprep.subr.bf16.mxu0 0
    %306 = vmatpush1.bf16.xpose.msra.mxu0 0
    %307 = vmatprep.subr.bf16.mxu0 0
    %308 = vmatpush1.bf16.xpose.msra.mxu0 0
    %309 = vmatprep.subr.bf16.mxu0 0
    %310 = vmatpush1.bf16.xpose.msra.mxu0 0
    %311 = vmatprep.subr.bf16.mxu0 0
    %312 = vmatpush1.bf16.xpose.msra.mxu0 0
    %313 = vmatprep.mubr.bf16.mxu0 0
    %314 = vmatmul.mubr.bf16.gmra.mrb[0].mxu0 %v276
    %v315 = vpop.f32.mrb[0].mxu0
    %v316 = vadd.f32 0.0, %v315
    %v317 = vpop.f32.mrb[0].mxu0
    %v318 = vpop.f32.mrb[0].mxu0
    %v319 = vpop.f32.mrb[0].mxu0
    %320 = vdwg.mxu0
    %v321 = vsel %vm274, %v316, -inf
    %322 = vmax.xlane.f32.xlu0 %v321
    %v323 = vpop.xlane.xlu0 %322
    %v324 = vsub.f32 %v316, %v323
    %v325 = vmul.f32 %v324, 1.442695
    %v326 = vpow.pop %v325
    %v327 = vsel %vm274, %v326, 0.0
    %328 = vadd.xlane.f32.xlu0 %v327
    %v329 = vpop.xlane.xlu0 %328
    %v330 = vrcp.pop %v329
    %v331 = vmul.f32 %v326, %v330
    %v332 = vpack.c.bf16 %v331, %v331
    %vm333 = vcmask 60416
    %334 = vst.msk [vmem:[#allocation10] sm:$0xf] %vm333, %v332
    %v336 = vsel %vm274, %v332, 0
    %vm338 = vcmask 1043456
    %v340 = vsel %vm338, %v273, 0
    %342 = vmatprep.subr.bf16.mxu0 0
    %343 = vmatpush1.bf16.msra.mxu0 %v340
    %344 = vmatprep.subr.bf16.mxu0 0
    %345 = vmatpush1.bf16.msra.mxu0 0
    %346 = vmatprep.subr.bf16.mxu0 0
    %347 = vmatpush1.bf16.msra.mxu0 0
    %348 = vmatprep.subr.bf16.mxu0 0
    %349 = vmatpush1.bf16.msra.mxu0 0
    %350 = vmatprep.subr.bf16.mxu0 0
    %351 = vmatpush1.bf16.msra.mxu0 0
    %352 = vmatprep.subr.bf16.mxu0 0
    %353 = vmatpush1.bf16.msra.mxu0 0
    %354 = vmatprep.subr.bf16.mxu0 0
    %355 = vmatpush1.bf16.msra.mxu0 0
    %356 = vmatprep.subr.bf16.mxu0 0
    %357 = vmatpush1.bf16.msra.mxu0 0
    %358 = vmatprep.subr.bf16.mxu0 0
    %359 = vmatpush1.bf16.msra.mxu0 0
    %360 = vmatprep.subr.bf16.mxu0 0
    %361 = vmatpush1.bf16.msra.mxu0 0
    %362 = vmatprep.subr.bf16.mxu0 0
    %363 = vmatpush1.bf16.msra.mxu0 0
    %364 = vmatprep.subr.bf16.mxu0 0
    %365 = vmatpush1.bf16.msra.mxu0 0
    %366 = vmatprep.subr.bf16.mxu0 0
    %367 = vmatpush1.bf16.msra.mxu0 0
    %368 = vmatprep.subr.bf16.mxu0 0
    %369 = vmatpush1.bf16.msra.mxu0 0
    %370 = vmatprep.subr.bf16.mxu0 0
    %371 = vmatpush1.bf16.msra.mxu0 0
    %372 = vmatprep.subr.bf16.mxu0 0
    %373 = vmatpush1.bf16.msra.mxu0 0
    %374 = vmatprep.mubr.bf16.mxu0 0
    %375 = vmatmul.mubr.bf16.gmra.mrb[0].mxu0 %v336
    %v376 = vpop.f32.mrb[0].mxu0
    %v377 = vadd.f32 0.0, %v376
    %v378 = vpop.f32.mrb[0].mxu0
    %v379 = vpop.f32.mrb[0].mxu0
    %v380 = vpop.f32.mrb[0].mxu0
    %381 = vdwg.mxu0
    %s382 = sadd.s32 %s264, 1
    %s383 = smul.addr %s382, 4
    %s384 = scalar_lea.vmem [#allocation2], %s383
    %v385 = vld [vmem:[%s384] sm:$0xf]
    %s386 = smul.addr %s382, 4
    %s387 = scalar_lea.vmem [#allocation3], %s386
    %v388 = vld [vmem:[%s387] sm:$0xf]
    %s389 = smul.addr %s382, 4
    %s390 = scalar_lea.vmem [#allocation4], %s389
    %v391 = vld [vmem:[%s390] sm:$0xf]
    %v393 = vsel %vm274, %v385, 0
    %v396 = vsel %vm274, %v388, 0
    %398 = vmatprep.subr.bf16.mxu0 0
    %399 = vmatpush1.bf16.xpose.msra.mxu0 %v396
    %400 = vmatprep.subr.bf16.mxu0 0
    %401 = vmatpush1.bf16.xpose.msra.mxu0 0
    %402 = vmatprep.subr.bf16.mxu0 0
    %403 = vmatpush1.bf16.xpose.msra.mxu0 0
    %404 = vmatprep.subr.bf16.mxu0 0
    %405 = vmatpush1.bf16.xpose.msra.mxu0 0
    %406 = vmatprep.subr.bf16.mxu0 0
    %407 = vmatpush1.bf16.xpose.msra.mxu0 0
    %408 = vmatprep.subr.bf16.mxu0 0
    %409 = vmatpush1.bf16.xpose.msra.mxu0 0
    %410 = vmatprep.subr.bf16.mxu0 0
    %411 = vmatpush1.bf16.xpose.msra.mxu0 0
    %412 = vmatprep.subr.bf16.mxu0 0
    %413 = vmatpush1.bf16.xpose.msra.mxu0 0
    %414 = vmatprep.subr.bf16.mxu0 0
    %415 = vmatpush1.bf16.xpose.msra.mxu0 0
    %416 = vmatprep.subr.bf16.mxu0 0
    %417 = vmatpush1.bf16.xpose.msra.mxu0 0
    %418 = vmatprep.subr.bf16.mxu0 0
    %419 = vmatpush1.bf16.xpose.msra.mxu0 0
    %420 = vmatprep.subr.bf16.mxu0 0
    %421 = vmatpush1.bf16.xpose.msra.mxu0 0
    %422 = vmatprep.subr.bf16.mxu0 0
    %423 = vmatpush1.bf16.xpose.msra.mxu0 0
    %424 = vmatprep.subr.bf16.mxu0 0
    %425 = vmatpush1.bf16.xpose.msra.mxu0 0
    %426 = vmatprep.subr.bf16.mxu0 0
    %427 = vmatpush1.bf16.xpose.msra.mxu0 0
    %428 = vmatprep.subr.bf16.mxu0 0
    %429 = vmatpush1.bf16.xpose.msra.mxu0 0
    %430 = vmatprep.mubr.bf16.mxu0 0
    %431 = vmatmul.mubr.bf16.gmra.mrb[0].mxu0 %v393
    %v432 = vpop.f32.mrb[0].mxu0
    %v433 = vadd.f32 0.0, %v432
    %v434 = vpop.f32.mrb[0].mxu0
    %v435 = vpop.f32.mrb[0].mxu0
    %v436 = vpop.f32.mrb[0].mxu0
    %437 = vdwg.mxu0
    %v438 = vsel %vm274, %v433, -inf
    %439 = vmax.xlane.f32.xlu0 %v438
    %v440 = vpop.xlane.xlu0 %439
    %v441 = vsub.f32 %v433, %v440
    %v442 = vmul.f32 %v441, 1.442695
    %v443 = vpow.pop %v442
    %v444 = vsel %vm274, %v443, 0.0
    %445 = vadd.xlane.f32.xlu0 %v444
    %v446 = vpop.xlane.xlu0 %445
    %v447 = vrcp.pop %v446
    %v448 = vmul.f32 %v443, %v447
    %v449 = vpack.c.bf16 %v448, %v448
    %s450 = scalar_lea.vmem [#allocation10], 4
    %451 = vst.msk [vmem:[%s450] sm:$0xf] %vm333, %v449
    %v453 = vsel %vm274, %v449, 0
    %v456 = vsel %vm338, %v391, 0
    %458 = vmatprep.subr.bf16.mxu0 0
    %459 = vmatpush1.bf16.msra.mxu0 %v456
    %460 = vmatprep.subr.bf16.mxu0 0
    %461 = vmatpush1.bf16.msra.mxu0 0
    %462 = vmatprep.subr.bf16.mxu0 0
    %463 = vmatpush1.bf16.msra.mxu0 0
    %464 = vmatprep.subr.bf16.mxu0 0
    %465 = vmatpush1.bf16.msra.mxu0 0
    %466 = vmatprep.subr.bf16.mxu0 0
    %467 = vmatpush1.bf16.msra.mxu0 0
    %468 = vmatprep.subr.bf16.mxu0 0
    %469 = vmatpush1.bf16.msra.mxu0 0
    %470 = vmatprep.subr.bf16.mxu0 0
    %471 = vmatpush1.bf16.msra.mxu0 0
    %472 = vmatprep.subr.bf16.mxu0 0
    %473 = vmatpush1.bf16.msra.mxu0 0
    %474 = vmatprep.subr.bf16.mxu0 0
    %475 = vmatpush1.bf16.msra.mxu0 0
    %476 = vmatprep.subr.bf16.mxu0 0
    %477 = vmatpush1.bf16.msra.mxu0 0
    %478 = vmatprep.subr.bf16.mxu0 0
    %479 = vmatpush1.bf16.msra.mxu0 0
    %480 = vmatprep.subr.bf16.mxu0 0
    %481 = vmatpush1.bf16.msra.mxu0 0
    %482 = vmatprep.subr.bf16.mxu0 0
    %483 = vmatpush1.bf16.msra.mxu0 0
    %484 = vmatprep.subr.bf16.mxu0 0
    %485 = vmatpush1.bf16.msra.mxu0 0
    %486 = vmatprep.subr.bf16.mxu0 0
    %487 = vmatpush1.bf16.msra.mxu0 0
    %488 = vmatprep.subr.bf16.mxu0 0
    %489 = vmatpush1.bf16.msra.mxu0 0
    %490 = vmatprep.mubr.bf16.mxu0 0
    %491 = vmatmul.mubr.bf16.gmra.mrb[0].mxu0 %v453
    %v492 = vpop.f32.mrb[0].mxu0
    %v493 = vadd.f32 0.0, %v492
    %v494 = vpop.f32.mrb[0].mxu0
    %v495 = vpop.f32.mrb[0].mxu0
    %v496 = vpop.f32.mrb[0].mxu0
    %497 = vdwg.mxu0
    %s498 = sadd.s32 %s264, 2
    %s499 = smul.addr %s498, 4
    %s500 = scalar_lea.vmem [#allocation2], %s499
    %v501 = vld [vmem:[%s500] sm:$0xf]
    %s502 = smul.addr %s498, 4
    %s503 = scalar_lea.vmem [#allocation3], %s502
    %v504 = vld [vmem:[%s503] sm:$0xf]
    %s505 = smul.addr %s498, 4
    %s506 = scalar_lea.vmem [#allocation4], %s505
    %v507 = vld [vmem:[%s506] sm:$0xf]
    %v509 = vsel %vm274, %v501, 0
    %v512 = vsel %vm274, %v504, 0
    %514 = vmatprep.subr.bf16.mxu0 0
    %515 = vmatpush1.bf16.xpose.msra.mxu0 %v512
    %516 = vmatprep.subr.bf16.mxu0 0
    %517 = vmatpush1.bf16.xpose.msra.mxu0 0
    %518 = vmatprep.subr.bf16.mxu0 0
    %519 = vmatpush1.bf16.xpose.msra.mxu0 0
    %520 = vmatprep.subr.bf16.mxu0 0
    %521 = vmatpush1.bf16.xpose.msra.mxu0 0
    %522 = vmatprep.subr.bf16.mxu0 0
    %523 = vmatpush1.bf16.xpose.msra.mxu0 0
    %524 = vmatprep.subr.bf16.mxu0 0
    %525 = vmatpush1.bf16.xpose.msra.mxu0 0
    %526 = vmatprep.subr.bf16.mxu0 0
    %527 = vmatpush1.bf16.xpose.msra.mxu0 0
    %528 = vmatprep.subr.bf16.mxu0 0
    %529 = vmatpush1.bf16.xpose.msra.mxu0 0
    %530 = vmatprep.subr.bf16.mxu0 0
    %531 = vmatpush1.bf16.xpose.msra.mxu0 0
    %532 = vmatprep.subr.bf16.mxu0 0
    %533 = vmatpush1.bf16.xpose.msra.mxu0 0
    %534 = vmatprep.subr.bf16.mxu0 0
    %535 = vmatpush1.bf16.xpose.msra.mxu0 0
    %536 = vmatprep.subr.bf16.mxu0 0
    %537 = vmatpush1.bf16.xpose.msra.mxu0 0
    %538 = vmatprep.subr.bf16.mxu0 0
    %539 = vmatpush1.bf16.xpose.msra.mxu0 0
    %540 = vmatprep.subr.bf16.mxu0 0
    %541 = vmatpush1.bf16.xpose.msra.mxu0 0
    %542 = vmatprep.subr.bf16.mxu0 0
    %543 = vmatpush1.bf16.xpose.msra.mxu0 0
    %544 = vmatprep.subr.bf16.mxu0 0
    %545 = vmatpush1.bf16.xpose.msra.mxu0 0
    %546 = vmatprep.mubr.bf16.mxu0 0
    %547 = vmatmul.mubr.bf16.gmra.mrb[0].mxu0 %v509
    %v548 = vpop.f32.mrb[0].mxu0
    %v549 = vadd.f32 0.0, %v548
    %v550 = vpop.f32.mrb[0].mxu0
    %v551 = vpop.f32.mrb[0].mxu0
    %v552 = vpop.f32.mrb[0].mxu0
    %553 = vdwg.mxu0
    %v554 = vsel %vm274, %v549, -inf
    %555 = vmax.xlane.f32.xlu0 %v554
    %v556 = vpop.xlane.xlu0 %555
    %v557 = vsub.f32 %v549, %v556
    %v558 = vmul.f32 %v557, 1.442695
    %v559 = vpow.pop %v558
    %v560 = vsel %vm274, %v559, 0.0
    %561 = vadd.xlane.f32.xlu0 %v560
    %v562 = vpop.xlane.xlu0 %561
    %v563 = vrcp.pop %v562
    %v564 = vmul.f32 %v559, %v563
    %v565 = vpack.c.bf16 %v564, %v564
    %s566 = scalar_lea.vmem [#allocation10], 8
    %567 = vst.msk [vmem:[%s566] sm:$0xf] %vm333, %v565
    %v569 = vsel %vm274, %v565, 0
    %v572 = vsel %vm338, %v507, 0
    %574 = vmatprep.subr.bf16.mxu0 0
    %575 = vmatpush1.bf16.msra.mxu0 %v572
    %576 = vmatprep.subr.bf16.mxu0 0
    %577 = vmatpush1.bf16.msra.mxu0 0
    %578 = vmatprep.subr.bf16.mxu0 0
    %579 = vmatpush1.bf16.msra.mxu0 0
    %580 = vmatprep.subr.bf16.mxu0 0
    %581 = vmatpush1.bf16.msra.mxu0 0
    %582 = vmatprep.subr.bf16.mxu0 0
    %583 = vmatpush1.bf16.msra.mxu0 0
    %584 = vmatprep.subr.bf16.mxu0 0
    %585 = vmatpush1.bf16.msra.mxu0 0
    %586 = vmatprep.subr.bf16.mxu0 0
    %587 = vmatpush1.bf16.msra.mxu0 0
    %588 = vmatprep.subr.bf16.mxu0 0
    %589 = vmatpush1.bf16.msra.mxu0 0
    %590 = vmatprep.subr.bf16.mxu0 0
    %591 = vmatpush1.bf16.msra.mxu0 0
    %592 = vmatprep.subr.bf16.mxu0 0
    %593 = vmatpush1.bf16.msra.mxu0 0
    %594 = vmatprep.subr.bf16.mxu0 0
    %595 = vmatpush1.bf16.msra.mxu0 0
    %596 = vmatprep.subr.bf16.mxu0 0
    %597 = vmatpush1.bf16.msra.mxu0 0
    %598 = vmatprep.subr.bf16.mxu0 0
    %599 = vmatpush1.bf16.msra.mxu0 0
    %600 = vmatprep.subr.bf16.mxu0 0
    %601 = vmatpush1.bf16.msra.mxu0 0
    %602 = vmatprep.subr.bf16.mxu0 0
    %603 = vmatpush1.bf16.msra.mxu0 0
    %604 = vmatprep.subr.bf16.mxu0 0
    %605 = vmatpush1.bf16.msra.mxu0 0
    %606 = vmatprep.mubr.bf16.mxu0 0
    %607 = vmatmul.mubr.bf16.gmra.mrb[0].mxu0 %v569
    %v608 = vpop.f32.mrb[0].mxu0
    %v609 = vadd.f32 0.0, %v608
    %v610 = vpop.f32.mrb[0].mxu0
    %v611 = vpop.f32.mrb[0].mxu0
    %v612 = vpop.f32.mrb[0].mxu0
    %613 = vdwg.mxu0
    %s614 = sadd.s32 %s264, 3
    %s615 = smul.addr %s614, 4
    %s616 = scalar_lea.vmem [#allocation2], %s615
    %v617 = vld [vmem:[%s616] sm:$0xf]
    %s618 = smul.addr %s614, 4
    %s619 = scalar_lea.vmem [#allocation3], %s618
    %v620 = vld [vmem:[%s619] sm:$0xf]
    %s621 = smul.addr %s614, 4
    %s622 = scalar_lea.vmem [#allocation4], %s621
    %v623 = vld [vmem:[%s622] sm:$0xf]
    %v625 = vsel %vm274, %v617, 0
    %v628 = vsel %vm274, %v620, 0
    %630 = vmatprep.subr.bf16.mxu0 0
    %631 = vmatpush1.bf16.xpose.msra.mxu0 %v628
    %632 = vmatprep.subr.bf16.mxu0 0
    %633 = vmatpush1.bf16.xpose.msra.mxu0 0
    %634 = vmatprep.subr.bf16.mxu0 0
    %635 = vmatpush1.bf16.xpose.msra.mxu0 0
    %636 = vmatprep.subr.bf16.mxu0 0
    %637 = vmatpush1.bf16.xpose.msra.mxu0 0
    %638 = vmatprep.subr.bf16.mxu0 0
    %639 = vmatpush1.bf16.xpose.msra.mxu0 0
    %640 = vmatprep.subr.bf16.mxu0 0
    %641 = vmatpush1.bf16.xpose.msra.mxu0 0
    %642 = vmatprep.subr.bf16.mxu0 0
    %643 = vmatpush1.bf16.xpose.msra.mxu0 0
    %644 = vmatprep.subr.bf16.mxu0 0
    %645 = vmatpush1.bf16.xpose.msra.mxu0 0
    %646 = vmatprep.subr.bf16.mxu0 0
    %647 = vmatpush1.bf16.xpose.msra.mxu0 0
    %648 = vmatprep.subr.bf16.mxu0 0
    %649 = vmatpush1.bf16.xpose.msra.mxu0 0
    %650 = vmatprep.subr.bf16.mxu0 0
    %651 = vmatpush1.bf16.xpose.msra.mxu0 0
    %652 = vmatprep.subr.bf16.mxu0 0
    %653 = vmatpush1.bf16.xpose.msra.mxu0 0
    %654 = vmatprep.subr.bf16.mxu0 0
    %655 = vmatpush1.bf16.xpose.msra.mxu0 0
    %656 = vmatprep.subr.bf16.mxu0 0
    %657 = vmatpush1.bf16.xpose.msra.mxu0 0
    %658 = vmatprep.subr.bf16.mxu0 0
    %659 = vmatpush1.bf16.xpose.msra.mxu0 0
    %660 = vmatprep.subr.bf16.mxu0 0
    %661 = vmatpush1.bf16.xpose.msra.mxu0 0
    %662 = vmatprep.mubr.bf16.mxu0 0
    %663 = vmatmul.mubr.bf16.gmra.mrb[0].mxu0 %v625
    %v664 = vpop.f32.mrb[0].mxu0
    %v665 = vadd.f32 0.0, %v664
    %v666 = vpop.f32.mrb[0].mxu0
    %v667 = vpop.f32.mrb[0].mxu0
    %v668 = vpop.f32.mrb[0].mxu0
    %669 = vdwg.mxu0
    %v670 = vsel %vm274, %v665, -inf
    %671 = vmax.xlane.f32.xlu0 %v670
    %v672 = vpop.xlane.xlu0 %671
    %v673 = vsub.f32 %v665, %v672
    %v674 = vmul.f32 %v673, 1.442695
    %v675 = vpow.pop %v674
    %v676 = vsel %vm274, %v675, 0.0
    %677 = vadd.xlane.f32.xlu0 %v676
    %v678 = vpop.xlane.xlu0 %677
    %v679 = vrcp.pop %v678
    %v680 = vmul.f32 %v675, %v679
    %v681 = vpack.c.bf16 %v680, %v680
    %s682 = scalar_lea.vmem [#allocation10], 12
    %683 = vst.msk [vmem:[%s682] sm:$0xf] %vm333, %v681
    %v685 = vsel %vm274, %v681, 0
    %v688 = vsel %vm338, %v623, 0
    %690 = vmatprep.subr.bf16.mxu0 0
    %691 = vmatpush1.bf16.msra.mxu0 %v688
    %692 = vmatprep.subr.bf16.mxu0 0
    %693 = vmatpush1.bf16.msra.mxu0 0
    %694 = vmatprep.subr.bf16.mxu0 0
    %695 = vmatpush1.bf16.msra.mxu0 0
    %696 = vmatprep.subr.bf16.mxu0 0
    %697 = vmatpush1.bf16.msra.mxu0 0
    %698 = vmatprep.subr.bf16.mxu0 0
    %699 = vmatpush1.bf16.msra.mxu0 0
    %700 = vmatprep.subr.bf16.mxu0 0
    %701 = vmatpush1.bf16.msra.mxu0 0
    %702 = vmatprep.subr.bf16.mxu0 0
    %703 = vmatpush1.bf16.msra.mxu0 0
    %704 = vmatprep.subr.bf16.mxu0 0
    %705 = vmatpush1.bf16.msra.mxu0 0
    %706 = vmatprep.subr.bf16.mxu0 0
    %707 = vmatpush1.bf16.msra.mxu0 0
    %708 = vmatprep.subr.bf16.mxu0 0
    %709 = vmatpush1.bf16.msra.mxu0 0
    %710 = vmatprep.subr.bf16.mxu0 0
    %711 = vmatpush1.bf16.msra.mxu0 0
    %712 = vmatprep.subr.bf16.mxu0 0
    %713 = vmatpush1.bf16.msra.mxu0 0
    %714 = vmatprep.subr.bf16.mxu0 0
    %715 = vmatpush1.bf16.msra.mxu0 0
    %716 = vmatprep.subr.bf16.mxu0 0
    %717 = vmatpush1.bf16.msra.mxu0 0
    %718 = vmatprep.subr.bf16.mxu0 0
    %719 = vmatpush1.bf16.msra.mxu0 0
    %720 = vmatprep.subr.bf16.mxu0 0
    %721 = vmatpush1.bf16.msra.mxu0 0
    %722 = vmatprep.mubr.bf16.mxu0 0
    %723 = vmatmul.mubr.bf16.gmra.mrb[0].mxu0 %v685
    %v724 = vpop.f32.mrb[0].mxu0
    %v725 = vadd.f32 0.0, %v724
    %v726 = vpop.f32.mrb[0].mxu0
    %v727 = vpop.f32.mrb[0].mxu0
    %v728 = vpop.f32.mrb[0].mxu0
    %729 = vdwg.mxu0
    %731 = vrot.lane.b32.xlu0 %v493, 8
    %v732 = vpop.permute.xlu0 %731
    %735 = vrot.lane.b32.xlu0 %v609, 16
    %v736 = vpop.permute.xlu0 %735
    %739 = vrot.lane.b32.xlu0 %v725, 24
    %v740 = vpop.permute.xlu0 %739
    %v742 = vsel %vm274, %v377, %v732
    %vm743 = vcmask 130048
    %v744 = vsel %vm743, %v742, %v736
    %vm745 = vcmask 195584
    %v746 = vsel %vm745, %v744, %v740
    %s747 = sadd.s32 %s264, 4
    %s748 = smul.addr %s747, 4
    %s749 = scalar_lea.vmem [#allocation2], %s748
    %v750 = vld [vmem:[%s749] sm:$0xf]
    %s751 = smul.addr %s747, 4
    %s752 = scalar_lea.vmem [#allocation3], %s751
    %v753 = vld [vmem:[%s752] sm:$0xf]
    %s754 = smul.addr %s747, 4
    %s755 = scalar_lea.vmem [#allocation4], %s754
    %v756 = vld [vmem:[%s755] sm:$0xf]
    %v758 = vsel %vm274, %v750, 0
    %v761 = vsel %vm274, %v753, 0
    %763 = vmatprep.subr.bf16.mxu0 0
    %764 = vmatpush1.bf16.xpose.msra.mxu0 %v761
    %765 = vmatprep.subr.bf16.mxu0 0
    %766 = vmatpush1.bf16.xpose.msra.mxu0 0
    %767 = vmatprep.subr.bf16.mxu0 0
    %768 = vmatpush1.bf16.xpose.msra.mxu0 0
    %769 = vmatprep.subr.bf16.mxu0 0
    %770 = vmatpush1.bf16.xpose.msra.mxu0 0
    %771 = vmatprep.subr.bf16.mxu0 0
    %772 = vmatpush1.bf16.xpose.msra.mxu0 0
    %773 = vmatprep.subr.bf16.mxu0 0
    %774 = vmatpush1.bf16.xpose.msra.mxu0 0
    %775 = vmatprep.subr.bf16.mxu0 0
    %776 = vmatpush1.bf16.xpose.msra.mxu0 0
    %777 = vmatprep.subr.bf16.mxu0 0
    %778 = vmatpush1.bf16.xpose.msra.mxu0 0
    %779 = vmatprep.subr.bf16.mxu0 0
    %780 = vmatpush1.bf16.xpose.msra.mxu0 0
    %781 = vmatprep.subr.bf16.mxu0 0
    %782 = vmatpush1.bf16.xpose.msra.mxu0 0
    %783 = vmatprep.subr.bf16.mxu0 0
    %784 = vmatpush1.bf16.xpose.msra.mxu0 0
    %785 = vmatprep.subr.bf16.mxu0 0
    %786 = vmatpush1.bf16.xpose.msra.mxu0 0
    %787 = vmatprep.subr.bf16.mxu0 0
    %788 = vmatpush1.bf16.xpose.msra.mxu0 0
    %789 = vmatprep.subr.bf16.mxu0 0
    %790 = vmatpush1.bf16.xpose.msra.mxu0 0
    %791 = vmatprep.subr.bf16.mxu0 0
    %792 = vmatpush1.bf16.xpose.msra.mxu0 0
    %793 = vmatprep.subr.bf16.mxu0 0
    %794 = vmatpush1.bf16.xpose.msra.mxu0 0
    %795 = vmatprep.mubr.bf16.mxu0 0
    %796 = vmatmul.mubr.bf16.gmra.mrb[0].mxu0 %v758
    %v797 = vpop.f32.mrb[0].mxu0
    %v798 = vadd.f32 0.0, %v797
    %v799 = vpop.f32.mrb[0].mxu0
    %v800 = vpop.f32.mrb[0].mxu0
    %v801 = vpop.f32.mrb[0].mxu0
    %802 = vdwg.mxu0
    %v803 = vsel %vm274, %v798, -inf
    %804 = vmax.xlane.f32.xlu0 %v803
    %v805 = vpop.xlane.xlu0 %804
    %v806 = vsub.f32 %v798, %v805
    %v807 = vmul.f32 %v806, 1.442695
    %v808 = vpow.pop %v807
    %v809 = vsel %vm274, %v808, 0.0
    %810 = vadd.xlane.f32.xlu0 %v809
    %v811 = vpop.xlane.xlu0 %810
    %v812 = vrcp.pop %v811
    %v813 = vmul.f32 %v808, %v812
    %v814 = vpack.c.bf16 %v813, %v813
    %s815 = scalar_lea.vmem [#allocation10], 16
    %816 = vst.msk [vmem:[%s815] sm:$0xf] %vm333, %v814
    %v818 = vsel %vm274, %v814, 0
    %v821 = vsel %vm338, %v756, 0
    %823 = vmatprep.subr.bf16.mxu0 0
    %824 = vmatpush1.bf16.msra.mxu0 %v821
    %825 = vmatprep.subr.bf16.mxu0 0
    %826 = vmatpush1.bf16.msra.mxu0 0
    %827 = vmatprep.subr.bf16.mxu0 0
    %828 = vmatpush1.bf16.msra.mxu0 0
    %829 = vmatprep.subr.bf16.mxu0 0
    %830 = vmatpush1.bf16.msra.mxu0 0
    %831 = vmatprep.subr.bf16.mxu0 0
    %832 = vmatpush1.bf16.msra.mxu0 0
    %833 = vmatprep.subr.bf16.mxu0 0
    %834 = vmatpush1.bf16.msra.mxu0 0
    %835 = vmatprep.subr.bf16.mxu0 0
    %836 = vmatpush1.bf16.msra.mxu0 0
    %837 = vmatprep.subr.bf16.mxu0 0
    %838 = vmatpush1.bf16.msra.mxu0 0
    %839 = vmatprep.subr.bf16.mxu0 0
    %840 = vmatpush1.bf16.msra.mxu0 0
    %841 = vmatprep.subr.bf16.mxu0 0
    %842 = vmatpush1.bf16.msra.mxu0 0
    %843 = vmatprep.subr.bf16.mxu0 0
    %844 = vmatpush1.bf16.msra.mxu0 0
    %845 = vmatprep.subr.bf16.mxu0 0
    %846 = vmatpush1.bf16.msra.mxu0 0
    %847 = vmatprep.subr.bf16.mxu0 0
    %848 = vmatpush1.bf16.msra.mxu0 0
    %849 = vmatprep.subr.bf16.mxu0 0
    %850 = vmatpush1.bf16.msra.mxu0 0
    %851 = vmatprep.subr.bf16.mxu0 0
    %852 = vmatpush1.bf16.msra.mxu0 0
    %853 = vmatprep.subr.bf16.mxu0 0
    %854 = vmatpush1.bf16.msra.mxu0 0
    %855 = vmatprep.mubr.bf16.mxu0 0
    %856 = vmatmul.mubr.bf16.gmra.mrb[0].mxu0 %v818
    %v857 = vpop.f32.mrb[0].mxu0
    %v858 = vadd.f32 0.0, %v857
    %v859 = vpop.f32.mrb[0].mxu0
    %v860 = vpop.f32.mrb[0].mxu0
    %v861 = vpop.f32.mrb[0].mxu0
    %862 = vdwg.mxu0
    %s863 = sadd.s32 %s382, 4
    %s864 = smul.addr %s863, 4
    %s865 = scalar_lea.vmem [#allocation2], %s864
    %v866 = vld [vmem:[%s865] sm:$0xf]
    %s867 = smul.addr %s863, 4
    %s868 = scalar_lea.vmem [#allocation3], %s867
    %v869 = vld [vmem:[%s868] sm:$0xf]
    %s870 = smul.addr %s863, 4
    %s871 = scalar_lea.vmem [#allocation4], %s870
    %v872 = vld [vmem:[%s871] sm:$0xf]
    %v874 = vsel %vm274, %v866, 0
    %v877 = vsel %vm274, %v869, 0
    %879 = vmatprep.subr.bf16.mxu0 0
    %880 = vmatpush1.bf16.xpose.msra.mxu0 %v877
    %881 = vmatprep.subr.bf16.mxu0 0
    %882 = vmatpush1.bf16.xpose.msra.mxu0 0
    %883 = vmatprep.subr.bf16.mxu0 0
    %884 = vmatpush1.bf16.xpose.msra.mxu0 0
    %885 = vmatprep.subr.bf16.mxu0 0
    %886 = vmatpush1.bf16.xpose.msra.mxu0 0
    %887 = vmatprep.subr.bf16.mxu0 0
    %888 = vmatpush1.bf16.xpose.msra.mxu0 0
    %889 = vmatprep.subr.bf16.mxu0 0
    %890 = vmatpush1.bf16.xpose.msra.mxu0 0
    %891 = vmatprep.subr.bf16.mxu0 0
    %892 = vmatpush1.bf16.xpose.msra.mxu0 0
    %893 = vmatprep.subr.bf16.mxu0 0
    %894 = vmatpush1.bf16.xpose.msra.mxu0 0
    %895 = vmatprep.subr.bf16.mxu0 0
    %896 = vmatpush1.bf16.xpose.msra.mxu0 0
    %897 = vmatprep.subr.bf16.mxu0 0
    %898 = vmatpush1.bf16.xpose.msra.mxu0 0
    %899 = vmatprep.subr.bf16.mxu0 0
    %900 = vmatpush1.bf16.xpose.msra.mxu0 0
    %901 = vmatprep.subr.bf16.mxu0 0
    %902 = vmatpush1.bf16.xpose.msra.mxu0 0
    %903 = vmatprep.subr.bf16.mxu0 0
    %904 = vmatpush1.bf16.xpose.msra.mxu0 0
    %905 = vmatprep.subr.bf16.mxu0 0
    %906 = vmatpush1.bf16.xpose.msra.mxu0 0
    %907 = vmatprep.subr.bf16.mxu0 0
    %908 = vmatpush1.bf16.xpose.msra.mxu0 0
    %909 = vmatprep.subr.bf16.mxu0 0
    %910 = vmatpush1.bf16.xpose.msra.mxu0 0
    %911 = vmatprep.mubr.bf16.mxu0 0
    %912 = vmatmul.mubr.bf16.gmra.mrb[0].mxu0 %v874
    %v913 = vpop.f32.mrb[0].mxu0
    %v914 = vadd.f32 0.0, %v913
    %v915 = vpop.f32.mrb[0].mxu0
    %v916 = vpop.f32.mrb[0].mxu0
    %v917 = vpop.f32.mrb[0].mxu0
    %918 = vdwg.mxu0
    %v919 = vsel %vm274, %v914, -inf
    %920 = vmax.xlane.f32.xlu0 %v919
    %v921 = vpop.xlane.xlu0 %920
    %v922 = vsub.f32 %v914, %v921
    %v923 = vmul.f32 %v922, 1.442695
    %v924 = vpow.pop %v923
    %v925 = vsel %vm274, %v924, 0.0
    %926 = vadd.xlane.f32.xlu0 %v925
    %v927 = vpop.xlane.xlu0 %926
    %v928 = vrcp.pop %v927
    %v929 = vmul.f32 %v924, %v928
    %v930 = vpack.c.bf16 %v929, %v929
    %s931 = scalar_lea.vmem [#allocation10], 20
    %932 = vst.msk [vmem:[%s931] sm:$0xf] %vm333, %v930
    %v934 = vsel %vm274, %v930, 0
    %v937 = vsel %vm338, %v872, 0
    %939 = vmatprep.subr.bf16.mxu0 0
    %940 = vmatpush1.bf16.msra.mxu0 %v937
    %941 = vmatprep.subr.bf16.mxu0 0
    %942 = vmatpush1.bf16.msra.mxu0 0
    %943 = vmatprep.subr.bf16.mxu0 0
    %944 = vmatpush1.bf16.msra.mxu0 0
    %945 = vmatprep.subr.bf16.mxu0 0
    %946 = vmatpush1.bf16.msra.mxu0 0
    %947 = vmatprep.subr.bf16.mxu0 0
    %948 = vmatpush1.bf16.msra.mxu0 0
    %949 = vmatprep.subr.bf16.mxu0 0
    %950 = vmatpush1.bf16.msra.mxu0 0
    %951 = vmatprep.subr.bf16.mxu0 0
    %952 = vmatpush1.bf16.msra.mxu0 0
    %953 = vmatprep.subr.bf16.mxu0 0
    %954 = vmatpush1.bf16.msra.mxu0 0
    %955 = vmatprep.subr.bf16.mxu0 0
    %956 = vmatpush1.bf16.msra.mxu0 0
    %957 = vmatprep.subr.bf16.mxu0 0
    %958 = vmatpush1.bf16.msra.mxu0 0
    %959 = vmatprep.subr.bf16.mxu0 0
    %960 = vmatpush1.bf16.msra.mxu0 0
    %961 = vmatprep.subr.bf16.mxu0 0
    %962 = vmatpush1.bf16.msra.mxu0 0
    %963 = vmatprep.subr.bf16.mxu0 0
    %964 = vmatpush1.bf16.msra.mxu0 0
    %965 = vmatprep.subr.bf16.mxu0 0
    %966 = vmatpush1.bf16.msra.mxu0 0
    %967 = vmatprep.subr.bf16.mxu0 0
    %968 = vmatpush1.bf16.msra.mxu0 0
    %969 = vmatprep.subr.bf16.mxu0 0
    %970 = vmatpush1.bf16.msra.mxu0 0
    %971 = vmatprep.mubr.bf16.mxu0 0
    %972 = vmatmul.mubr.bf16.gmra.mrb[0].mxu0 %v934
    %v973 = vpop.f32.mrb[0].mxu0
    %v974 = vadd.f32 0.0, %v973
    %v975 = vpop.f32.mrb[0].mxu0
    %v976 = vpop.f32.mrb[0].mxu0
    %v977 = vpop.f32.mrb[0].mxu0
    %978 = vdwg.mxu0
    %s979 = sadd.s32 %s498, 4
    %s980 = smul.addr %s979, 4
    %s981 = scalar_lea.vmem [#allocation2], %s980
    %v982 = vld [vmem:[%s981] sm:$0xf]
    %s983 = smul.addr %s979, 4
    %s984 = scalar_lea.vmem [#allocation3], %s983
    %v985 = vld [vmem:[%s984] sm:$0xf]
    %s986 = smul.addr %s979, 4
    %s987 = scalar_lea.vmem [#allocation4], %s986
    %v988 = vld [vmem:[%s987] sm:$0xf]
    %v990 = vsel %vm274, %v982, 0
    %v993 = vsel %vm274, %v985, 0
    %995 = vmatprep.subr.bf16.mxu0 0
    %996 = vmatpush1.bf16.xpose.msra.mxu0 %v993
    %997 = vmatprep.subr.bf16.mxu0 0
    %998 = vmatpush1.bf16.xpose.msra.mxu0 0
    %999 = vmatprep.subr.bf16.mxu0 0
    %1000 = vmatpush1.bf16.xpose.msra.mxu0 0
    %1001 = vmatprep.subr.bf16.mxu0 0
    %1002 = vmatpush1.bf16.xpose.msra.mxu0 0
    %1003 = vmatprep.subr.bf16.mxu0 0
    %1004 = vmatpush1.bf16.xpose.msra.mxu0 0
    %1005 = vmatprep.subr.bf16.mxu0 0
    %1006 = vmatpush1.bf16.xpose.msra.mxu0 0
    %1007 = vmatprep.subr.bf16.mxu0 0
    %1008 = vmatpush1.bf16.xpose.msra.mxu0 0
    %1009 = vmatprep.subr.bf16.mxu0 0
    %1010 = vmatpush1.bf16.xpose.msra.mxu0 0
    %1011 = vmatprep.subr.bf16.mxu0 0
    %1012 = vmatpush1.bf16.xpose.msra.mxu0 0
    %1013 = vmatprep.subr.bf16.mxu0 0
    %1014 = vmatpush1.bf16.xpose.msra.mxu0 0
    %1015 = vmatprep.subr.bf16.mxu0 0
    %1016 = vmatpush1.bf16.xpose.msra.mxu0 0
    %1017 = vmatprep.subr.bf16.mxu0 0
    %1018 = vmatpush1.bf16.xpose.msra.mxu0 0
    %1019 = vmatprep.subr.bf16.mxu0 0
    %1020 = vmatpush1.bf16.xpose.msra.mxu0 0
    %1021 = vmatprep.subr.bf16.mxu0 0
    %1022 = vmatpush1.bf16.xpose.msra.mxu0 0
    %1023 = vmatprep.subr.bf16.mxu0 0
    %1024 = vmatpush1.bf16.xpose.msra.mxu0 0
    %1025 = vmatprep.subr.bf16.mxu0 0
    %1026 = vmatpush1.bf16.xpose.msra.mxu0 0
    %1027 = vmatprep.mubr.bf16.mxu0 0
    %1028 = vmatmul.mubr.bf16.gmra.mrb[0].mxu0 %v990
    %v1029 = vpop.f32.mrb[0].mxu0
    %v1030 = vadd.f32 0.0, %v1029
    %v1031 = vpop.f32.mrb[0].mxu0
    %v1032 = vpop.f32.mrb[0].mxu0
    %v1033 = vpop.f32.mrb[0].mxu0
    %1034 = vdwg.mxu0
    %v1035 = vsel %vm274, %v1030, -inf
    %1036 = vmax.xlane.f32.xlu0 %v1035
    %v1037 = vpop.xlane.xlu0 %1036
    %v1038 = vsub.f32 %v1030, %v1037
    %v1039 = vmul.f32 %v1038, 1.442695
    %v1040 = vpow.pop %v1039
    %v1041 = vsel %vm274, %v1040, 0.0
    %1042 = vadd.xlane.f32.xlu0 %v1041
    %v1043 = vpop.xlane.xlu0 %1042
    %v1044 = vrcp.pop %v1043
    %v1045 = vmul.f32 %v1040, %v1044
    %v1046 = vpack.c.bf16 %v1045, %v1045
    %s1047 = scalar_lea.vmem [#allocation10], 24
    %1048 = vst.msk [vmem:[%s1047] sm:$0xf] %vm333, %v1046
    %v1050 = vsel %vm274, %v1046, 0
    %v1053 = vsel %vm338, %v988, 0
    %1055 = vmatprep.subr.bf16.mxu0 0
    %1056 = vmatpush1.bf16.msra.mxu0 %v1053
    %1057 = vmatprep.subr.bf16.mxu0 0
    %1058 = vmatpush1.bf16.msra.mxu0 0
    %1059 = vmatprep.subr.bf16.mxu0 0
    %1060 = vmatpush1.bf16.msra.mxu0 0
    %1061 = vmatprep.subr.bf16.mxu0 0
    %1062 = vmatpush1.bf16.msra.mxu0 0
    %1063 = vmatprep.subr.bf16.mxu0 0
    %1064 = vmatpush1.bf16.msra.mxu0 0
    %1065 = vmatprep.subr.bf16.mxu0 0
    %1066 = vmatpush1.bf16.msra.mxu0 0
    %1067 = vmatprep.subr.bf16.mxu0 0
    %1068 = vmatpush1.bf16.msra.mxu0 0
    %1069 = vmatprep.subr.bf16.mxu0 0
    %1070 = vmatpush1.bf16.msra.mxu0 0
    %1071 = vmatprep.subr.bf16.mxu0 0
    %1072 = vmatpush1.bf16.msra.mxu0 0
    %1073 = vmatprep.subr.bf16.mxu0 0
    %1074 = vmatpush1.bf16.msra.mxu0 0
    %1075 = vmatprep.subr.bf16.mxu0 0
    %1076 = vmatpush1.bf16.msra.mxu0 0
    %1077 = vmatprep.subr.bf16.mxu0 0
    %1078 = vmatpush1.bf16.msra.mxu0 0
    %1079 = vmatprep.subr.bf16.mxu0 0
    %1080 = vmatpush1.bf16.msra.mxu0 0
    %1081 = vmatprep.subr.bf16.mxu0 0
    %1082 = vmatpush1.bf16.msra.mxu0 0
    %1083 = vmatprep.subr.bf16.mxu0 0
    %1084 = vmatpush1.bf16.msra.mxu0 0
    %1085 = vmatprep.subr.bf16.mxu0 0
    %1086 = vmatpush1.bf16.msra.mxu0 0
    %1087 = vmatprep.mubr.bf16.mxu0 0
    %1088 = vmatmul.mubr.bf16.gmra.mrb[0].mxu0 %v1050
    %v1089 = vpop.f32.mrb[0].mxu0
    %v1090 = vadd.f32 0.0, %v1089
    %v1091 = vpop.f32.mrb[0].mxu0
    %v1092 = vpop.f32.mrb[0].mxu0
    %v1093 = vpop.f32.mrb[0].mxu0
    %1094 = vdwg.mxu0
    %s1095 = sadd.s32 %s614, 4
    %s1096 = smul.addr %s1095, 4
    %s1097 = scalar_lea.vmem [#allocation2], %s1096
    %v1098 = vld [vmem:[%s1097] sm:$0xf]
    %s1099 = smul.addr %s1095, 4
    %s1100 = scalar_lea.vmem [#allocation3], %s1099
    %v1101 = vld [vmem:[%s1100] sm:$0xf]
    %s1102 = smul.addr %s1095, 4
    %s1103 = scalar_lea.vmem [#allocation4], %s1102
    %v1104 = vld [vmem:[%s1103] sm:$0xf]
    %v1106 = vsel %vm274, %v1098, 0
    %v1109 = vsel %vm274, %v1101, 0
    %1111 = vmatprep.subr.bf16.mxu0 0
    %1112 = vmatpush1.bf16.xpose.msra.mxu0 %v1109
    %1113 = vmatprep.subr.bf16.mxu0 0
    %1114 = vmatpush1.bf16.xpose.msra.mxu0 0
    %1115 = vmatprep.subr.bf16.mxu0 0
    %1116 = vmatpush1.bf16.xpose.msra.mxu0 0
    %1117 = vmatprep.subr.bf16.mxu0 0
    %1118 = vmatpush1.bf16.xpose.msra.mxu0 0
    %1119 = vmatprep.subr.bf16.mxu0 0
    %1120 = vmatpush1.bf16.xpose.msra.mxu0 0
    %1121 = vmatprep.subr.bf16.mxu0 0
    %1122 = vmatpush1.bf16.xpose.msra.mxu0 0
    %1123 = vmatprep.subr.bf16.mxu0 0
    %1124 = vmatpush1.bf16.xpose.msra.mxu0 0
    %1125 = vmatprep.subr.bf16.mxu0 0
    %1126 = vmatpush1.bf16.xpose.msra.mxu0 0
    %1127 = vmatprep.subr.bf16.mxu0 0
    %1128 = vmatpush1.bf16.xpose.msra.mxu0 0
    %1129 = vmatprep.subr.bf16.mxu0 0
    %1130 = vmatpush1.bf16.xpose.msra.mxu0 0
    %1131 = vmatprep.subr.bf16.mxu0 0
    %1132 = vmatpush1.bf16.xpose.msra.mxu0 0
    %1133 = vmatprep.subr.bf16.mxu0 0
    %1134 = vmatpush1.bf16.xpose.msra.mxu0 0
    %1135 = vmatprep.subr.bf16.mxu0 0
    %1136 = vmatpush1.bf16.xpose.msra.mxu0 0
    %1137 = vmatprep.subr.bf16.mxu0 0
    %1138 = vmatpush1.bf16.xpose.msra.mxu0 0
    %1139 = vmatprep.subr.bf16.mxu0 0
    %1140 = vmatpush1.bf16.xpose.msra.mxu0 0
    %1141 = vmatprep.subr.bf16.mxu0 0
    %1142 = vmatpush1.bf16.xpose.msra.mxu0 0
    %1143 = vmatprep.mubr.bf16.mxu0 0
    %1144 = vmatmul.mubr.bf16.gmra.mrb[0].mxu0 %v1106
    %v1145 = vpop.f32.mrb[0].mxu0
    %v1146 = vadd.f32 0.0, %v1145
    %v1147 = vpop.f32.mrb[0].mxu0
    %v1148 = vpop.f32.mrb[0].mxu0
    %v1149 = vpop.f32.mrb[0].mxu0
    %1150 = vdwg.mxu0
    %v1151 = vsel %vm274, %v1146, -inf
    %1152 = vmax.xlane.f32.xlu0 %v1151
    %v1153 = vpop.xlane.xlu0 %1152
    %v1154 = vsub.f32 %v1146, %v1153
    %v1155 = vmul.f32 %v1154, 1.442695
    %v1156 = vpow.pop %v1155
    %v1157 = vsel %vm274, %v1156, 0.0
    %1158 = vadd.xlane.f32.xlu0 %v1157
    %v1159 = vpop.xlane.xlu0 %1158
    %v1160 = vrcp.pop %v1159
    %v1161 = vmul.f32 %v1156, %v1160
    %v1162 = vpack.c.bf16 %v1161, %v1161
    %s1163 = scalar_lea.vmem [#allocation10], 28
    %1164 = vst.msk [vmem:[%s1163] sm:$0xf] %vm333, %v1162
    %v1166 = vsel %vm274, %v1162, 0
    %v1169 = vsel %vm338, %v1104, 0
    %1171 = vmatprep.subr.bf16.mxu0 0
    %1172 = vmatpush1.bf16.msra.mxu0 %v1169
    %1173 = vmatprep.subr.bf16.mxu0 0
    %1174 = vmatpush1.bf16.msra.mxu0 0
    %1175 = vmatprep.subr.bf16.mxu0 0
    %1176 = vmatpush1.bf16.msra.mxu0 0
    %1177 = vmatprep.subr.bf16.mxu0 0
    %1178 = vmatpush1.bf16.msra.mxu0 0
    %1179 = vmatprep.subr.bf16.mxu0 0
    %1180 = vmatpush1.bf16.msra.mxu0 0
    %1181 = vmatprep.subr.bf16.mxu0 0
    %1182 = vmatpush1.bf16.msra.mxu0 0
    %1183 = vmatprep.subr.bf16.mxu0 0
    %1184 = vmatpush1.bf16.msra.mxu0 0
    %1185 = vmatprep.subr.bf16.mxu0 0
    %1186 = vmatpush1.bf16.msra.mxu0 0
    %1187 = vmatprep.subr.bf16.mxu0 0
    %1188 = vmatpush1.bf16.msra.mxu0 0
    %1189 = vmatprep.subr.bf16.mxu0 0
    %1190 = vmatpush1.bf16.msra.mxu0 0
    %1191 = vmatprep.subr.bf16.mxu0 0
    %1192 = vmatpush1.bf16.msra.mxu0 0
    %1193 = vmatprep.subr.bf16.mxu0 0
    %1194 = vmatpush1.bf16.msra.mxu0 0
    %1195 = vmatprep.subr.bf16.mxu0 0
    %1196 = vmatpush1.bf16.msra.mxu0 0
    %1197 = vmatprep.subr.bf16.mxu0 0
    %1198 = vmatpush1.bf16.msra.mxu0 0
    %1199 = vmatprep.subr.bf16.mxu0 0
    %1200 = vmatpush1.bf16.msra.mxu0 0
    %1201 = vmatprep.subr.bf16.mxu0 0
    %1202 = vmatpush1.bf16.msra.mxu0 0
    %1203 = vmatprep.mubr.bf16.mxu0 0
    %1204 = vmatmul.mubr.bf16.gmra.mrb[0].mxu0 %v1166
    %v1205 = vpop.f32.mrb[0].mxu0
    %v1206 = vadd.f32 0.0, %v1205
    %v1207 = vpop.f32.mrb[0].mxu0
    %v1208 = vpop.f32.mrb[0].mxu0
    %v1209 = vpop.f32.mrb[0].mxu0
    %1210 = vdwg.mxu0
    %1212 = vrot.lane.b32.xlu0 %v974, 8
    %v1213 = vpop.permute.xlu0 %1212
    %1216 = vrot.lane.b32.xlu0 %v1090, 16
    %v1217 = vpop.permute.xlu0 %1216
    %1220 = vrot.lane.b32.xlu0 %v1206, 24
    %v1221 = vpop.permute.xlu0 %1220
    %v1223 = vsel %vm274, %v858, %v1213
    %v1224 = vsel %vm743, %v1223, %v1217
    %v1225 = vsel %vm745, %v1224, %v1221
    %v1226 = vpack.c.bf16 %v1225, %v746
    %v1227 = vld [vmem:[#allocation5] sm:$0xff]
    %v1228 = vld [vmem:[#allocation5 + $0x8] sm:$0xff]
    %v1229 = vld [vmem:[%s3] sm:$0xf]
    %v1230 = vld [vmem:[%s3 + $0x4] sm:$0xf]
    %v1231 = vld [vmem:[%s3 + $0x8] sm:$0xf]
    %v1232 = vld [vmem:[%s3 + $0xc] sm:$0xf]
    %v1237 = vunpack.c.l.b16 %v1229
    %v1238 = vunpack.c.l.b16 %v1230
    %v1239 = vunpack.c.l.b16 %v1231
    %v1240 = vunpack.c.l.b16 %v1232
    %v1241 = vpack.c.b16 %v1238, %v1237
    %v1242 = vpack.c.b16 %v1240, %v1239
    %vm1245 = vcmask 261120
    %v1247 = vsel %vm1245, %v1226, 0
    %1249 = vmatprep.subr.bf16.mxu0 0
    %1250 = vmatpush1.bf16.msra.mxu0 %v1241
    %1251 = vmatprep.subr.bf16.mxu0 0
    %1252 = vmatpush1.bf16.msra.mxu0 %v1242
    %1253 = vmatprep.subr.bf16.mxu0 0
    %1254 = vmatpush1.bf16.msra.mxu0 0
    %1255 = vmatprep.subr.bf16.mxu0 0
    %1256 = vmatpush1.bf16.msra.mxu0 0
    %1257 = vmatprep.subr.bf16.mxu0 0
    %1258 = vmatpush1.bf16.msra.mxu0 0
    %1259 = vmatprep.subr.bf16.mxu0 0
    %1260 = vmatpush1.bf16.msra.mxu0 0
    %1261 = vmatprep.subr.bf16.mxu0 0
    %1262 = vmatpush1.bf16.msra.mxu0 0
    %1263 = vmatprep.subr.bf16.mxu0 0
    %1264 = vmatpush1.bf16.msra.mxu0 0
    %1265 = vmatprep.subr.bf16.mxu0 0
    %1266 = vmatpush1.bf16.msra.mxu0 0
    %1267 = vmatprep.subr.bf16.mxu0 0
    %1268 = vmatpush1.bf16.msra.mxu0 0
    %1269 = vmatprep.subr.bf16.mxu0 0
    %1270 = vmatpush1.bf16.msra.mxu0 0
    %1271 = vmatprep.subr.bf16.mxu0 0
    %1272 = vmatpush1.bf16.msra.mxu0 0
    %1273 = vmatprep.subr.bf16.mxu0 0
    %1274 = vmatpush1.bf16.msra.mxu0 0
    %1275 = vmatprep.subr.bf16.mxu0 0
    %1276 = vmatpush1.bf16.msra.mxu0 0
    %1277 = vmatprep.subr.bf16.mxu0 0
    %1278 = vmatpush1.bf16.msra.mxu0 0
    %1279 = vmatprep.subr.bf16.mxu0 0
    %1280 = vmatpush1.bf16.msra.mxu0 0
    %1281 = vmatprep.mubr.bf16.mxu0 0
    %1282 = vmatmul.mubr.bf16.gmra.mrb[0].mxu0 %v1247
    %v1283 = vpop.f32.mrb[0].mxu0
    %v1284 = vadd.f32 0.0, %v1283
    %v1285 = vpop.f32.mrb[0].mxu0
    %v1286 = vpop.f32.mrb[0].mxu0
    %v1287 = vadd.f32 0.0, %v1286
    %v1288 = vpop.f32.mrb[0].mxu0
    %1289 = vdwg.mxu0
    %v1290 = vadd.f32 %v1227, %v1284
    %v1291 = vadd.f32 %v1228, %v1287
    %1292 = vst.msk [vmem:[#allocation5] sm:$0xff] %vm1245, %v1290
    %1293 = vst.msk [vmem:[#allocation5 + $0x8] sm:$0xff] %vm1245, %v1291
    // Predicated region
    $region54: #{tpu_custom_call.1} parent=1 // pred_check
      %p1294 = pneg %p57
    $region55: #{tpu_custom_call.1} parent=1 // pred_check_branch
      %1296 = sbr.rel (%p1294) target = $region57
    $region56: #{tpu_custom_call.1} parent=1 // pred_region
      %v1297 = vld [vmem:[%s0] sm:$0xff]
      %v1298 = vld [vmem:[%s0 + $0x8] sm:$0xff]
      %v1299 = vld [vmem:[#allocation5] sm:$0xff]
      %v1300 = vld [vmem:[#allocation5 + $0x8] sm:$0xff]
      %v1301 = vadd.f32 %v1297, %v1299
      %v1302 = vadd.f32 %v1298, %v1300
      %v1303 = vld [vmem:[%s4] sm:$0x1]
      %v1305 = vlaneseq
      %v1306 = vshrl.u32 %v1305, 7
      %v1307 = vsub.s32 0, %v1306
      %v1308 = vrot.slane %v1303, %v1307
      %v1310 = vadd.f32 %v1301, %v1308
      %v1311 = vadd.f32 %v1302, %v1308
      %v1312 = vpack.c.bf16 %v1311, %v1310
      %v1313 = vld [vmem:[#allocation6] sm:$0xf]
      %v1314 = vld [vmem:[#allocation6 + $0x4] sm:$0xf]
      %v1315 = vld [vmem:[#allocation6 + $0x8] sm:$0xf]
      %v1316 = vld [vmem:[#allocation6 + $0xc] sm:$0xf]
      %v1317 = vld [vmem:[%s6] sm:$0x1]
      %v1319 = vlaneseq
      %v1320 = vshrl.u32 %v1319, 7
      %v1321 = vsub.s32 0, %v1320
      %v1322 = vrot.slane %v1317, %v1321
      %v1328 = vunpack.c.l.b16 %v1313
      %v1329 = vunpack.c.l.b16 %v1314
      %v1330 = vunpack.c.l.b16 %v1315
      %v1331 = vunpack.c.l.b16 %v1316
      %v1332 = vpack.c.b16 %v1329, %v1328
      %v1333 = vpack.c.b16 %v1331, %v1330
      %v1337 = vsel %vm1245, %v1312, 0
      %1339 = vmatprep.subr.bf16.mxu0 0
      %1340 = vmatpush1.bf16.msra.mxu0 %v1332
      %1341 = vmatprep.subr.bf16.mxu0 0
      %1342 = vmatpush1.bf16.msra.mxu0 %v1333
      %1343 = vmatprep.subr.bf16.mxu0 0
      %1344 = vmatpush1.bf16.msra.mxu0 0
      %1345 = vmatprep.subr.bf16.mxu0 0
      %1346 = vmatpush1.bf16.msra.mxu0 0
      %1347 = vmatprep.subr.bf16.mxu0 0
      %1348 = vmatpush1.bf16.msra.mxu0 0
      %1349 = vmatprep.subr.bf16.mxu0 0
      %1350 = vmatpush1.bf16.msra.mxu0 0
      %1351 = vmatprep.subr.bf16.mxu0 0
      %1352 = vmatpush1.bf16.msra.mxu0 0
      %1353 = vmatprep.subr.bf16.mxu0 0
      %1354 = vmatpush1.bf16.msra.mxu0 0
      %1355 = vmatprep.subr.bf16.mxu0 0
      %1356 = vmatpush1.bf16.msra.mxu0 0
      %1357 = vmatprep.subr.bf16.mxu0 0
      %1358 = vmatpush1.bf16.msra.mxu0 0
      %1359 = vmatprep.subr.bf16.mxu0 0
      %1360 = vmatpush1.bf16.msra.mxu0 0
      %1361 = vmatprep.subr.bf16.mxu0 0
      %1362 = vmatpush1.bf16.msra.mxu0 0
      %1363 = vmatprep.subr.bf16.mxu0 0
      %1364 = vmatpush1.bf16.msra.mxu0 0
      %1365 = vmatprep.subr.bf16.mxu0 0
      %1366 = vmatpush1.bf16.msra.mxu0 0
      %1367 = vmatprep.subr.bf16.mxu0 0
      %1368 = vmatpush1.bf16.msra.mxu0 0
      %1369 = vmatprep.subr.bf16.mxu0 0
      %1370 = vmatpush1.bf16.msra.mxu0 0
      %1371 = vmatprep.mubr.bf16.mxu0 0
      %1372 = vmatmul.mubr.bf16.gmra.mrb[0].mxu0 %v1337
      %v1373 = vpop.f32.mrb[0].mxu0
      %v1374 = vadd.f32 %v1322, %v1373
      %v1375 = vpop.f32.mrb[0].mxu0
      %v1376 = vpop.f32.mrb[0].mxu0
      %v1377 = vadd.f32 %v1322, %v1376
      %v1378 = vpop.f32.mrb[0].mxu0
      %1379 = vdwg.mxu0
      %v1380 = vmul.f32 %v1374, 0.5
      %v1381 = vmul.f32 %v1377, 0.5
      %v1382 = vmul.f32 %v1374, 0.044715
      %v1383 = vmul.f32 %v1377, 0.044715
      %v1384 = vmul.f32 %v1382, %v1374
      %v1385 = vmul.f32 %v1383, %v1377
      %v1386 = vmul.f32 %v1384, %v1374
      %v1387 = vmul.f32 %v1385, %v1377
      %v1388 = vadd.f32 %v1374, %v1386
      %v1389 = vadd.f32 %v1377, %v1387
      %v1390 = vmul.f32 %v1388, 0.7978846
      %v1391 = vmul.f32 %v1389, 0.7978846
      %v1392 = vtanh.pop %v1390
      %v1393 = vtanh.pop %v1391
      %v1394 = vadd.f32 %v1392, 1.0
      %v1395 = vadd.f32 %v1393, 1.0
      %v1396 = vmul.f32 %v1380, %v1394
      %v1397 = vmul.f32 %v1381, %v1395
      %v1398 = vpack.c.bf16 %v1397, %v1396
      %v1399 = vld [vmem:[%s7] sm:$0xf]
      %v1400 = vld [vmem:[%s7 + $0x4] sm:$0xf]
      %v1401 = vld [vmem:[%s7 + $0x8] sm:$0xf]
      %v1402 = vld [vmem:[%s7 + $0xc] sm:$0xf]
      %v1403 = vld [vmem:[%s7 + $0x10] sm:$0xf]
      %v1404 = vld [vmem:[%s7 + $0x14] sm:$0xf]
      %v1405 = vld [vmem:[%s7 + $0x18] sm:$0xf]
      %v1406 = vld [vmem:[%s7 + $0x1c] sm:$0xf]
      %v1407 = vld [vmem:[%s8] sm:$0x1]
      %v1409 = vlaneseq
      %v1410 = vshrl.u32 %v1409, 7
      %v1411 = vsub.s32 0, %v1410
      %v1412 = vrot.slane %v1407, %v1411
      %v1422 = vunpack.c.l.b16 %v1399
      %v1423 = vunpack.c.l.b16 %v1400
      %v1424 = vunpack.c.l.b16 %v1401
      %v1425 = vunpack.c.l.b16 %v1402
      %v1426 = vunpack.c.l.b16 %v1403
      %v1427 = vunpack.c.l.b16 %v1404
      %v1428 = vunpack.c.l.b16 %v1405
      %v1429 = vunpack.c.l.b16 %v1406
      %v1430 = vpack.c.b16 %v1423, %v1422
      %v1431 = vpack.c.b16 %v1425, %v1424
      %v1432 = vpack.c.b16 %v1427, %v1426
      %v1433 = vpack.c.b16 %v1429, %v1428
      %vm1438 = vcmask 523264
      %v1440 = vsel %vm1438, %v1398, 0
      %1442 = vmatprep.subr.bf16.mxu0 0
      %1443 = vmatpush1.bf16.msra.mxu0 %v1430
      %1444 = vmatprep.subr.bf16.mxu0 0
      %1445 = vmatpush1.bf16.msra.mxu0 %v1431
      %1446 = vmatprep.subr.bf16.mxu0 0
      %1447 = vmatpush1.bf16.msra.mxu0 %v1432
      %1448 = vmatprep.subr.bf16.mxu0 0
      %1449 = vmatpush1.bf16.msra.mxu0 %v1433
      %1450 = vmatprep.subr.bf16.mxu0 0
      %1451 = vmatpush1.bf16.msra.mxu0 0
      %1452 = vmatprep.subr.bf16.mxu0 0
      %1453 = vmatpush1.bf16.msra.mxu0 0
      %1454 = vmatprep.subr.bf16.mxu0 0
      %1455 = vmatpush1.bf16.msra.mxu0 0
      %1456 = vmatprep.subr.bf16.mxu0 0
      %1457 = vmatpush1.bf16.msra.mxu0 0
      %1458 = vmatprep.subr.bf16.mxu0 0
      %1459 = vmatpush1.bf16.msra.mxu0 0
      %1460 = vmatprep.subr.bf16.mxu0 0
      %1461 = vmatpush1.bf16.msra.mxu0 0
      %1462 = vmatprep.subr.bf16.mxu0 0
      %1463 = vmatpush1.bf16.msra.mxu0 0
      %1464 = vmatprep.subr.bf16.mxu0 0
      %1465 = vmatpush1.bf16.msra.mxu0 0
      %1466 = vmatprep.subr.bf16.mxu0 0
      %1467 = vmatpush1.bf16.msra.mxu0 0
      %1468 = vmatprep.subr.bf16.mxu0 0
      %1469 = vmatpush1.bf16.msra.mxu0 0
      %1470 = vmatprep.subr.bf16.mxu0 0
      %1471 = vmatpush1.bf16.msra.mxu0 0
      %1472 = vmatprep.subr.bf16.mxu0 0
      %1473 = vmatpush1.bf16.msra.mxu0 0
      %1474 = vmatprep.mubr.bf16.mxu0 0
      %1475 = vmatmul.mubr.bf16.gmra.mrb[0].mxu0 %v1440
      %v1476 = vpop.f32.mrb[0].mxu0
      %v1477 = vadd.f32 %v1412, %v1476
      %v1478 = vpop.f32.mrb[0].mxu0
      %v1479 = vpop.f32.mrb[0].mxu0
      %v1480 = vadd.f32 %v1412, %v1479
      %v1481 = vpop.f32.mrb[0].mxu0
      %1482 = vdwg.mxu0
      %v1483 = vadd.f32 %v1310, %v1477
      %v1484 = vadd.f32 %v1311, %v1480
      %v1485 = vsel %vm1245, %v1483, 0.0
      %1486 = vadd.xlane.f32.xlu0 %v1485
      %v1487 = vpop.xlane.xlu0 %1486
      %v1488 = vsel %vm1245, %v1484, 0.0
      %1489 = vadd.xlane.f32.xlu0 %v1488
      %v1490 = vpop.xlane.xlu0 %1489
      %v1491 = vrcp.pop 32.0
      %v1492 = vmul.f32 %v1487, %v1491
      %v1493 = vmul.f32 %v1490, %v1491
      %v1494 = vsub.f32 %v1483, %v1492
      %v1495 = vsub.f32 %v1484, %v1493
      %v1496 = vmul.f32 %v1494, %v1494
      %v1497 = vmul.f32 %v1495, %v1495
      %v1498 = vsel %vm1245, %v1496, 0.0
      %1499 = vadd.xlane.f32.xlu0 %v1498
      %v1500 = vpop.xlane.xlu0 %1499
      %v1501 = vsel %vm1245, %v1497, 0.0
      %1502 = vadd.xlane.f32.xlu0 %v1501
      %v1503 = vpop.xlane.xlu0 %1502
      %v1504 = vmul.f32 %v1500, %v1491
      %v1505 = vmul.f32 %v1503, %v1491
      %v1506 = vadd.f32 %v1504, 1e-05
      %v1507 = vadd.f32 %v1505, 1e-05
      %v1508 = vrsqrt.pop %v1506
      %v1509 = vrsqrt.pop %v1507
      %v1510 = vmul.f32 %v1494, %v1508
      %v1511 = vmul.f32 %v1495, %v1509
      %v1512 = vld [vmem:[%s9] sm:$0x1]
      %v1514 = vlaneseq
      %v1515 = vshrl.u32 %v1514, 7
      %v1516 = vsub.s32 0, %v1515
      %v1517 = vrot.slane %v1512, %v1516
      %v1519 = vmul.f32 %v1510, %v1517
      %v1520 = vmul.f32 %v1511, %v1517
      %v1521 = vld [vmem:[%s10] sm:$0x1]
      %v1523 = vlaneseq
      %v1524 = vshrl.u32 %v1523, 7
      %v1525 = vsub.s32 0, %v1524
      %v1526 = vrot.slane %v1521, %v1525
      %v1528 = vadd.f32 %v1519, %v1526
      %v1529 = vadd.f32 %v1520, %v1526
      %1530 = vst.msk [vmem:[#allocation9] sm:$0xff] %vm1245, %v1528
      %1531 = vst.msk [vmem:[#allocation9 + $0x8] sm:$0xff] %vm1245, %v1529
    $region57: #{tpu_custom_call.1} parent=1 // pred_fallthru
      _
    // Predicated region
    $region58: #{tpu_custom_call.1} parent=1 // pred_check
      _
    $region59: #{tpu_custom_call.1} parent=1 // pred_check_branch
      %1533 = sbr.rel (0) target = $region61
    $region60: #{tpu_custom_call.1} parent=1 // pred_region
      %s1535 = ssub.s32 256, 256
      %1536 = vsyncadd [#allocation8], %s1535
      %s1537 = sshll.u32 [#allocation9], 4
      %s1538 = int_to_ptr.vmem [resolvable:$true] %s1537
      %1543 = dma.vmem_to_hbm [thread:$0]  %s1538, 256, %s11, [#allocation8], 128, 128, 8
    $region61: #{tpu_custom_call.1} parent=1 // pred_fallthru
      _
    // Predicated region
    $region62: #{tpu_custom_call.1} parent=1 // pred_check
      _
    $region63: #{tpu_custom_call.1} parent=1 // pred_check_branch
      %1545 = sbr.rel (0) target = $region65
    $region64: #{tpu_custom_call.1} parent=1 // pred_region
      %s1547 = ssub.s32 512, 512
      %1548 = vsyncadd [#allocation11], %s1547
      %s1549 = sshll.u32 [#allocation10], 4
      %s1550 = int_to_ptr.vmem [resolvable:$true] %s1549
      %1555 = dma.vmem_to_hbm [thread:$0]  %s1550, 512, %s12, [#allocation11], 64, 64, 4
    $region65: #{tpu_custom_call.1} parent=1 // pred_fallthru
      _
    // Predicated region
    $region66: #{tpu_custom_call.1} parent=1 // pred_check
      _
    $region67: #{tpu_custom_call.1} parent=1 // pred_check_branch
      %1557 = sbr.rel (0) target = $region69
    $region68: #{tpu_custom_call.1} parent=1 // pred_region
      %1558 = dma.done [#allocation8], 256
    $region69: #{tpu_custom_call.1} parent=1 // pred_fallthru
      _
    // Predicated region
    $region70: #{tpu_custom_call.1} parent=1 // pred_check
      _
    $region71: #{tpu_custom_call.1} parent=1 // pred_check_branch
      %1560 = sbr.rel (0) target = $region73
    $region72: #{tpu_custom_call.1} parent=1 // pred_region
      %1561 = dma.done [#allocation11], 512
    $region73: #{tpu_custom_call.1} parent=1 // pred_fallthru
      _
    %1562 = vsyncpa [#allocation7], 1
    %1563 = vsyncpa [#allocation8], 1
    %1564 = vsyncpa [#allocation11], 1

</llo_original>
